<compile_context>
chip_gen: v7x
topology: tpu7x:2x2x1
jax: 0.10.0
libtpu: 0.0.40
codegen_flags: <defaults>
</compile_context>

<pallas_src>
import functools

import numpy as np
import jax
import jax.numpy as jnp
from jax.experimental import pallas as pl
from jax.experimental.pallas import tpu as pltpu


def _isub_kernel(k_ref, y_ref, z_ref, fhr_ref, fhi_ref, bwr_ref, bwi_ref,
                 bkr_ref, bki_ref, out_ref, *, rho, h, w):
    fhr = fhr_ref[...]          # (h, h)        row-DFT real
    fhi = fhi_ref[...]          # (h, h)        row-DFT imag
    bwr = bwr_ref[...]          # (L, L)        kron(I_groups, Fw) real
    bwi = bwi_ref[...]          # (L, L)        kron(I_groups, Fw) imag
    bkr = bkr_ref[...]          # (bs*w, L)     kron(rep, Fw) real  (col-DFT + replicate)
    bki = bki_ref[...]          # (bs*w, L)     kron(rep, Fw) imag

    def mm(a, b):
        return jnp.dot(a, b, preferred_element_type=jnp.float32)

    # ---- OTF of k: row DFT, then fused column-DFT + channel replication -> (h, L)
    ks = k_ref[...]                                    # (h, bs*w)
    tkr = mm(fhr, ks)
    tki = mm(fhi, ks)
    vr = mm(tkr, bkr) - mm(tki, bki)
    vi = mm(tkr, bki) + mm(tki, bkr)

    # ---- per-group 2-D DFT of a lane-stacked real slab (h, L)
    def fft2(x):
        tr = mm(fhr, x)
        ti = mm(fhi, x)
        return mm(tr, bwr) - mm(ti, bwi), mm(tr, bwi) + mm(ti, bwr)

    yr, yi = fft2(y_ref[...])
    zr, zi = fft2(z_ref[...])

    # denominator = |V|^2 + rho; EUP reciprocal + one Newton step, with the 1/(h*w)
    # inverse-FFT normalization folded into the same factor.
    deno = vr * vr + vi * vi + rho
    inv = pl.reciprocal(deno, approx=True)
    inv = inv * (2.0 - deno * inv)
    inv = inv * (1.0 / float(h * w))

    # numerator = conj(V) * FFT(y) + rho * FFT(z)
    wr = (vr * yr + vi * yi + rho * zr) * inv
    wi = (vr * yi - vi * yr + rho * zi) * inv

    # real part of the inverse FFT: conj(Fh) @ W @ conj(Fw)   (scale already folded)
    pr = mm(fhr, wr) + mm(fhi, wi)
    pi = mm(fhr, wi) - mm(fhi, wr)
    out_ref[...] = mm(pr, bwr) + mm(pi, bwi)


def _dft_np(n):
    idx = np.arange(n, dtype=np.float64)
    theta = -2.0 * np.pi * np.outer(idx, idx) / float(n)
    return np.cos(theta).astype(np.float32), np.sin(theta).astype(np.float32)


@functools.partial(jax.jit, static_argnames=("rho",))
def _isub_impl(z, y, k, rho):
    bs, ch, h, w = z.shape
    nch = min(3, ch)            # torch module writes the first 3 channels
    f32 = jnp.float32

    ngroups = bs * nch
    # pad the lane axis to a multiple of 128 (lane-dense stores); only possible when
    # w divides 128 - otherwise keep the exact width (still correct, just masked).
    if 128 % w == 0:
        gpl = 128 // w
        ngroups_pad = ((ngroups + gpl - 1) // gpl) * gpl
    else:
        ngroups_pad = ngroups
    L = ngroups_pad * w

    # ---- constants, built with numpy at trace time -> baked into the executable
    fhr, fhi = _dft_np(h)
    fwr, fwi = _dft_np(w)
    eye = np.eye(ngroups_pad, dtype=np.float32)
    bwr = np.kron(eye, fwr)                             # (L, L) block-diag col DFT
    bwi = np.kron(eye, fwi)
    rep = np.zeros((bs, ngroups_pad), dtype=np.float32)  # group g <- batch g // nch
    for g in range(ngroups_pad):
        rep[min(g // nch, bs - 1), g] = 1.0
    bkr = np.kron(rep, fwr)                             # (bs*w, L) col DFT + replicate
    bki = np.kron(rep, fwi)

    # ---- lane-dense slabs: groups of w lanes, group index g = b*nch + c
    y_slab = jnp.transpose(y[:, :nch].astype(f32), (2, 0, 1, 3)).reshape(h, ngroups * w)
    z_slab = jnp.transpose(z[:, :nch].astype(f32), (2, 0, 1, 3)).reshape(h, ngroups * w)
    if L > ngroups * w:
        pad = ((0, 0), (0, L - ngroups * w))
        y_slab = jnp.pad(y_slab, pad)
        z_slab = jnp.pad(z_slab, pad)

    # psf2otf: PSF already spans the full plane, only the circular shift remains.
    k_shift = jnp.roll(k[:, 0].astype(f32),
                       shift=(-(h // 2), -(w // 2)), axis=(1, 2))       # (bs, h, w)
    k_slab = jnp.transpose(k_shift, (1, 0, 2)).reshape(h, bs * w)       # (h, bs*w)

    kernel = functools.partial(_isub_kernel, rho=float(rho), h=h, w=w)

    out_slab = pl.pallas_call(
        kernel,
        out_shape=jax.ShapeDtypeStruct((h, L), f32),
        grid=(1,),
        in_specs=[
            pl.BlockSpec((h, bs * w), lambda i: (0, 0)),    # k slab
            pl.BlockSpec((h, L), lambda i: (0, 0)),         # y slab
            pl.BlockSpec((h, L), lambda i: (0, 0)),         # z slab
            pl.BlockSpec((h, h), lambda i: (0, 0)),         # Fh real
            pl.BlockSpec((h, h), lambda i: (0, 0)),         # Fh imag
            pl.BlockSpec((L, L), lambda i: (0, 0)),         # kron(I, Fw) real
            pl.BlockSpec((L, L), lambda i: (0, 0)),         # kron(I, Fw) imag
            pl.BlockSpec((bs * w, L), lambda i: (0, 0)),    # kron(rep, Fw) real
            pl.BlockSpec((bs * w, L), lambda i: (0, 0)),    # kron(rep, Fw) imag
        ],
        out_specs=pl.BlockSpec((h, L), lambda i: (0, 0)),
        compiler_params=pltpu.CompilerParams(
            dimension_semantics=("arbitrary",),
            vmem_limit_bytes=32 * 1024 * 1024),
    )(k_slab, y_slab, z_slab, fhr, fhi, bwr, bwi, bkr, bki)

    # back to NCHW (drop the pad lanes)
    out3 = out_slab[:, :ngroups * w].reshape(h, bs, nch, w)
    out3 = jnp.transpose(out3, (1, 2, 0, 3)).astype(y.dtype)            # (bs, nch, h, w)
    if ch == nch:
        return out3
    zeros = jnp.zeros((bs, ch - nch, h, w), dtype=out3.dtype)           # channels >= 3 stay 0
    return jnp.concatenate([out3, zeros], axis=1)


def isub_layer(z, y, k, rho):
    """Pallas implementation of ISubLayer.forward.

    z, y: [bs, ch, h, w];  k: [bs, 1, h, w];  rho: python float.
    Returns [bs, ch, h, w]; only the first min(3, ch) channels are computed (as in the
    reference module), any extra channels are zero.
    """
    return _isub_impl(z, y, k, float(rho))


def _reference(z, y, k, rho):
    """Pure-JAX reference using jnp.fft (mirrors the torch semantics)."""
    bs, ch, h, w = z.shape
    nch = min(3, ch)
    k_shift = jnp.roll(k[:, 0], shift=(-(h // 2), -(w // 2)), axis=(1, 2))
    V = jnp.fft.fft2(k_shift)[:, None]                      # [bs, 1, h, w]
    Yf = jnp.fft.fft2(y[:, :nch])
    Zf = jnp.fft.fft2(z[:, :nch])
    deno = jnp.abs(V) ** 2 + rho
    num = jnp.conj(V) * Yf + rho * Zf
    res = jnp.real(jnp.fft.ifft2(num / deno))
    out = jnp.zeros_like(y)
    return out.at[:, :nch].set(res.astype(y.dtype))


if __name__ == "__main__":
    bs, ch, h, w = 2, 3, 16, 16
    rho = 0.1

    key = jax.random.PRNGKey(0)
    kz, ky, kk = jax.random.split(key, 3)
    z = jax.random.normal(kz, (bs, ch, h, w), dtype=jnp.float32)
    y = jax.random.normal(ky, (bs, ch, h, w), dtype=jnp.float32)
    k = jax.random.uniform(kk, (bs, 1, h, w), dtype=jnp.float32)
    k = k / jnp.sum(k, axis=(2, 3), keepdims=True)   # normalized PSF

    out = isub_layer(z, y, k, rho)
    out = jax.block_until_ready(out)

    ref = _reference(z, y, k, rho)
    assert out.shape == (bs, ch, h, w)
    assert jnp.allclose(out, ref, atol=1e-3, rtol=1e-3), (
        float(jnp.max(jnp.abs(out - ref))))

    print("KERNEL_OK")
</pallas_src>

<mosaic_0001>
module attributes {stable_mosaic.version = 11 : i64} {
  func.func @_isub_kernel(%arg0: i32, %arg1: memref<16x32xf32, #tpu.memory_space<vmem>>, %arg2: memref<16x128xf32, #tpu.memory_space<vmem>>, %arg3: memref<16x128xf32, #tpu.memory_space<vmem>>, %arg4: memref<16x16xf32, #tpu.memory_space<vmem>>, %arg5: memref<16x16xf32, #tpu.memory_space<vmem>>, %arg6: memref<128x128xf32, #tpu.memory_space<vmem>>, %arg7: memref<128x128xf32, #tpu.memory_space<vmem>>, %arg8: memref<32x128xf32, #tpu.memory_space<vmem>>, %arg9: memref<32x128xf32, #tpu.memory_space<vmem>>, %arg10: memref<16x128xf32, #tpu.memory_space<vmem>>) attributes {dimension_semantics = [#tpu.dimension_semantics<arbitrary>], iteration_bounds = array<i64: 1>, scalar_prefetch = 0 : i64, scratch_operands = 0 : i64, tpu.core_type = #tpu.core_type<tc>, window_params = [{pipeline_mode = #tpu.pipeline_mode<synchronous>, transform_indices = @transform_0, window_bounds = array<i64: 16, 32>}, {pipeline_mode = #tpu.pipeline_mode<synchronous>, transform_indices = @transform_1, window_bounds = array<i64: 16, 128>}, {pipeline_mode = #tpu.pipeline_mode<synchronous>, transform_indices = @transform_2, window_bounds = array<i64: 16, 128>}, {pipeline_mode = #tpu.pipeline_mode<synchronous>, transform_indices = @transform_3, window_bounds = array<i64: 16, 16>}, {pipeline_mode = #tpu.pipeline_mode<synchronous>, transform_indices = @transform_4, window_bounds = array<i64: 16, 16>}, {pipeline_mode = #tpu.pipeline_mode<synchronous>, transform_indices = @transform_5, window_bounds = array<i64: 128, 128>}, {pipeline_mode = #tpu.pipeline_mode<synchronous>, transform_indices = @transform_6, window_bounds = array<i64: 128, 128>}, {pipeline_mode = #tpu.pipeline_mode<synchronous>, transform_indices = @transform_7, window_bounds = array<i64: 32, 128>}, {pipeline_mode = #tpu.pipeline_mode<synchronous>, transform_indices = @transform_8, window_bounds = array<i64: 32, 128>}, {pipeline_mode = #tpu.pipeline_mode<synchronous>, transform_indices = @transform_9, window_bounds = array<i64: 16, 128>}]} {
    %c0 = arith.constant 0 : index
    %c0_0 = arith.constant 0 : index
    %0 = vector.load %arg4[%c0, %c0_0] : memref<16x16xf32, #tpu.memory_space<vmem>>, vector<16x16xf32>
    %c0_1 = arith.constant 0 : index
    %c0_2 = arith.constant 0 : index
    %1 = vector.load %arg5[%c0_1, %c0_2] : memref<16x16xf32, #tpu.memory_space<vmem>>, vector<16x16xf32>
    %c0_3 = arith.constant 0 : index
    %c0_4 = arith.constant 0 : index
    %2 = vector.load %arg6[%c0_3, %c0_4] : memref<128x128xf32, #tpu.memory_space<vmem>>, vector<128x128xf32>
    %c0_5 = arith.constant 0 : index
    %c0_6 = arith.constant 0 : index
    %3 = vector.load %arg7[%c0_5, %c0_6] : memref<128x128xf32, #tpu.memory_space<vmem>>, vector<128x128xf32>
    %c0_7 = arith.constant 0 : index
    %c0_8 = arith.constant 0 : index
    %4 = vector.load %arg8[%c0_7, %c0_8] : memref<32x128xf32, #tpu.memory_space<vmem>>, vector<32x128xf32>
    %c0_9 = arith.constant 0 : index
    %c0_10 = arith.constant 0 : index
    %5 = vector.load %arg9[%c0_9, %c0_10] : memref<32x128xf32, #tpu.memory_space<vmem>>, vector<32x128xf32>
    %c0_11 = arith.constant 0 : index
    %c0_12 = arith.constant 0 : index
    %6 = vector.load %arg1[%c0_11, %c0_12] : memref<16x32xf32, #tpu.memory_space<vmem>>, vector<16x32xf32>
    %cst = arith.constant dense<0.000000e+00> : vector<16x32xf32>
    %7 = tpu.matmul %0, %6, %cst {dimension_numbers = #tpu.dot_dimension_numbers<[1], [0], [0], [1], [0, 0, 1, 1], [], []>} : vector<16x16xf32>, vector<16x32xf32>, vector<16x32xf32> -> vector<16x32xf32>
    %cst_13 = arith.constant dense<0.000000e+00> : vector<16x32xf32>
    %8 = tpu.matmul %1, %6, %cst_13 {dimension_numbers = #tpu.dot_dimension_numbers<[1], [0], [0], [1], [0, 0, 1, 1], [], []>} : vector<16x16xf32>, vector<16x32xf32>, vector<16x32xf32> -> vector<16x32xf32>
    %cst_14 = arith.constant dense<0.000000e+00> : vector<16x128xf32>
    %9 = tpu.matmul %7, %4, %cst_14 {dimension_numbers = #tpu.dot_dimension_numbers<[1], [0], [0], [1], [0, 0, 1, 1], [], []>} : vector<16x32xf32>, vector<32x128xf32>, vector<16x128xf32> -> vector<16x128xf32>
    %cst_15 = arith.constant dense<0.000000e+00> : vector<16x128xf32>
    %10 = tpu.matmul %8, %5, %cst_15 {dimension_numbers = #tpu.dot_dimension_numbers<[1], [0], [0], [1], [0, 0, 1, 1], [], []>} : vector<16x32xf32>, vector<32x128xf32>, vector<16x128xf32> -> vector<16x128xf32>
    %11 = arith.subf %9, %10 : vector<16x128xf32>
    %cst_16 = arith.constant dense<0.000000e+00> : vector<16x128xf32>
    %12 = tpu.matmul %7, %5, %cst_16 {dimension_numbers = #tpu.dot_dimension_numbers<[1], [0], [0], [1], [0, 0, 1, 1], [], []>} : vector<16x32xf32>, vector<32x128xf32>, vector<16x128xf32> -> vector<16x128xf32>
    %cst_17 = arith.constant dense<0.000000e+00> : vector<16x128xf32>
    %13 = tpu.matmul %8, %4, %cst_17 {dimension_numbers = #tpu.dot_dimension_numbers<[1], [0], [0], [1], [0, 0, 1, 1], [], []>} : vector<16x32xf32>, vector<32x128xf32>, vector<16x128xf32> -> vector<16x128xf32>
    %14 = arith.addf %12, %13 : vector<16x128xf32>
    %c0_18 = arith.constant 0 : index
    %c0_19 = arith.constant 0 : index
    %15 = vector.load %arg2[%c0_18, %c0_19] : memref<16x128xf32, #tpu.memory_space<vmem>>, vector<16x128xf32>
    %cst_20 = arith.constant dense<0.000000e+00> : vector<16x128xf32>
    %16 = tpu.matmul %0, %15, %cst_20 {dimension_numbers = #tpu.dot_dimension_numbers<[1], [0], [0], [1], [0, 0, 1, 1], [], []>} : vector<16x16xf32>, vector<16x128xf32>, vector<16x128xf32> -> vector<16x128xf32>
    %cst_21 = arith.constant dense<0.000000e+00> : vector<16x128xf32>
    %17 = tpu.matmul %1, %15, %cst_21 {dimension_numbers = #tpu.dot_dimension_numbers<[1], [0], [0], [1], [0, 0, 1, 1], [], []>} : vector<16x16xf32>, vector<16x128xf32>, vector<16x128xf32> -> vector<16x128xf32>
    %cst_22 = arith.constant dense<0.000000e+00> : vector<16x128xf32>
    %18 = tpu.matmul %16, %2, %cst_22 {dimension_numbers = #tpu.dot_dimension_numbers<[1], [0], [0], [1], [0, 0, 1, 1], [], []>} : vector<16x128xf32>, vector<128x128xf32>, vector<16x128xf32> -> vector<16x128xf32>
    %cst_23 = arith.constant dense<0.000000e+00> : vector<16x128xf32>
    %19 = tpu.matmul %17, %3, %cst_23 {dimension_numbers = #tpu.dot_dimension_numbers<[1], [0], [0], [1], [0, 0, 1, 1], [], []>} : vector<16x128xf32>, vector<128x128xf32>, vector<16x128xf32> -> vector<16x128xf32>
    %20 = arith.subf %18, %19 : vector<16x128xf32>
    %cst_24 = arith.constant dense<0.000000e+00> : vector<16x128xf32>
    %21 = tpu.matmul %16, %3, %cst_24 {dimension_numbers = #tpu.dot_dimension_numbers<[1], [0], [0], [1], [0, 0, 1, 1], [], []>} : vector<16x128xf32>, vector<128x128xf32>, vector<16x128xf32> -> vector<16x128xf32>
    %cst_25 = arith.constant dense<0.000000e+00> : vector<16x128xf32>
    %22 = tpu.matmul %17, %2, %cst_25 {dimension_numbers = #tpu.dot_dimension_numbers<[1], [0], [0], [1], [0, 0, 1, 1], [], []>} : vector<16x128xf32>, vector<128x128xf32>, vector<16x128xf32> -> vector<16x128xf32>
    %23 = arith.addf %21, %22 : vector<16x128xf32>
    %c0_26 = arith.constant 0 : index
    %c0_27 = arith.constant 0 : index
    %24 = vector.load %arg3[%c0_26, %c0_27] : memref<16x128xf32, #tpu.memory_space<vmem>>, vector<16x128xf32>
    %cst_28 = arith.constant dense<0.000000e+00> : vector<16x128xf32>
    %25 = tpu.matmul %0, %24, %cst_28 {dimension_numbers = #tpu.dot_dimension_numbers<[1], [0], [0], [1], [0, 0, 1, 1], [], []>} : vector<16x16xf32>, vector<16x128xf32>, vector<16x128xf32> -> vector<16x128xf32>
    %cst_29 = arith.constant dense<0.000000e+00> : vector<16x128xf32>
    %26 = tpu.matmul %1, %24, %cst_29 {dimension_numbers = #tpu.dot_dimension_numbers<[1], [0], [0], [1], [0, 0, 1, 1], [], []>} : vector<16x16xf32>, vector<16x128xf32>, vector<16x128xf32> -> vector<16x128xf32>
    %cst_30 = arith.constant dense<0.000000e+00> : vector<16x128xf32>
    %27 = tpu.matmul %25, %2, %cst_30 {dimension_numbers = #tpu.dot_dimension_numbers<[1], [0], [0], [1], [0, 0, 1, 1], [], []>} : vector<16x128xf32>, vector<128x128xf32>, vector<16x128xf32> -> vector<16x128xf32>
    %cst_31 = arith.constant dense<0.000000e+00> : vector<16x128xf32>
    %28 = tpu.matmul %26, %3, %cst_31 {dimension_numbers = #tpu.dot_dimension_numbers<[1], [0], [0], [1], [0, 0, 1, 1], [], []>} : vector<16x128xf32>, vector<128x128xf32>, vector<16x128xf32> -> vector<16x128xf32>
    %29 = arith.subf %27, %28 : vector<16x128xf32>
    %cst_32 = arith.constant dense<0.000000e+00> : vector<16x128xf32>
    %30 = tpu.matmul %25, %3, %cst_32 {dimension_numbers = #tpu.dot_dimension_numbers<[1], [0], [0], [1], [0, 0, 1, 1], [], []>} : vector<16x128xf32>, vector<128x128xf32>, vector<16x128xf32> -> vector<16x128xf32>
    %cst_33 = arith.constant dense<0.000000e+00> : vector<16x128xf32>
    %31 = tpu.matmul %26, %2, %cst_33 {dimension_numbers = #tpu.dot_dimension_numbers<[1], [0], [0], [1], [0, 0, 1, 1], [], []>} : vector<16x128xf32>, vector<128x128xf32>, vector<16x128xf32> -> vector<16x128xf32>
    %32 = arith.addf %30, %31 : vector<16x128xf32>
    %33 = arith.mulf %11, %11 : vector<16x128xf32>
    %34 = arith.mulf %14, %14 : vector<16x128xf32>
    %35 = arith.addf %33, %34 : vector<16x128xf32>
    %cst_34 = arith.constant 1.000000e-01 : f32
    %36 = vector.broadcast %cst_34 : f32 to vector<16x128xf32>
    %37 = arith.addf %35, %36 : vector<16x128xf32>
    %38 = tpu.reciprocal %37 {approx = true} : vector<16x128xf32> -> vector<16x128xf32>
    %39 = arith.mulf %37, %38 : vector<16x128xf32>
    %cst_35 = arith.constant 2.000000e+00 : f32
    %40 = vector.broadcast %cst_35 : f32 to vector<16x128xf32>
    %41 = arith.subf %40, %39 : vector<16x128xf32>
    %42 = arith.mulf %38, %41 : vector<16x128xf32>
    %cst_36 = arith.constant 3.906250e-03 : f32
    %43 = vector.broadcast %cst_36 : f32 to vector<16x128xf32>
    %44 = arith.mulf %42, %43 : vector<16x128xf32>
    %45 = arith.mulf %11, %20 : vector<16x128xf32>
    %46 = arith.mulf %14, %23 : vector<16x128xf32>
    %47 = arith.addf %45, %46 : vector<16x128xf32>
    %cst_37 = arith.constant 1.000000e-01 : f32
    %48 = vector.broadcast %cst_37 : f32 to vector<16x128xf32>
    %49 = arith.mulf %48, %29 : vector<16x128xf32>
    %50 = arith.addf %47, %49 : vector<16x128xf32>
    %51 = arith.mulf %50, %44 : vector<16x128xf32>
    %52 = arith.mulf %11, %23 : vector<16x128xf32>
    %53 = arith.mulf %14, %20 : vector<16x128xf32>
    %54 = arith.subf %52, %53 : vector<16x128xf32>
    %cst_38 = arith.constant 1.000000e-01 : f32
    %55 = vector.broadcast %cst_38 : f32 to vector<16x128xf32>
    %56 = arith.mulf %55, %32 : vector<16x128xf32>
    %57 = arith.addf %54, %56 : vector<16x128xf32>
    %58 = arith.mulf %57, %44 : vector<16x128xf32>
    %cst_39 = arith.constant dense<0.000000e+00> : vector<16x128xf32>
    %59 = tpu.matmul %0, %51, %cst_39 {dimension_numbers = #tpu.dot_dimension_numbers<[1], [0], [0], [1], [0, 0, 1, 1], [], []>} : vector<16x16xf32>, vector<16x128xf32>, vector<16x128xf32> -> vector<16x128xf32>
    %cst_40 = arith.constant dense<0.000000e+00> : vector<16x128xf32>
    %60 = tpu.matmul %1, %58, %cst_40 {dimension_numbers = #tpu.dot_dimension_numbers<[1], [0], [0], [1], [0, 0, 1, 1], [], []>} : vector<16x16xf32>, vector<16x128xf32>, vector<16x128xf32> -> vector<16x128xf32>
    %61 = arith.addf %59, %60 : vector<16x128xf32>
    %cst_41 = arith.constant dense<0.000000e+00> : vector<16x128xf32>
    %62 = tpu.matmul %0, %58, %cst_41 {dimension_numbers = #tpu.dot_dimension_numbers<[1], [0], [0], [1], [0, 0, 1, 1], [], []>} : vector<16x16xf32>, vector<16x128xf32>, vector<16x128xf32> -> vector<16x128xf32>
    %cst_42 = arith.constant dense<0.000000e+00> : vector<16x128xf32>
    %63 = tpu.matmul %1, %51, %cst_42 {dimension_numbers = #tpu.dot_dimension_numbers<[1], [0], [0], [1], [0, 0, 1, 1], [], []>} : vector<16x16xf32>, vector<16x128xf32>, vector<16x128xf32> -> vector<16x128xf32>
    %64 = arith.subf %62, %63 : vector<16x128xf32>
    %cst_43 = arith.constant dense<0.000000e+00> : vector<16x128xf32>
    %65 = tpu.matmul %61, %2, %cst_43 {dimension_numbers = #tpu.dot_dimension_numbers<[1], [0], [0], [1], [0, 0, 1, 1], [], []>} : vector<16x128xf32>, vector<128x128xf32>, vector<16x128xf32> -> vector<16x128xf32>
    %cst_44 = arith.constant dense<0.000000e+00> : vector<16x128xf32>
    %66 = tpu.matmul %64, %3, %cst_44 {dimension_numbers = #tpu.dot_dimension_numbers<[1], [0], [0], [1], [0, 0, 1, 1], [], []>} : vector<16x128xf32>, vector<128x128xf32>, vector<16x128xf32> -> vector<16x128xf32>
    %67 = arith.addf %65, %66 : vector<16x128xf32>
    %c0_45 = arith.constant 0 : index
    %c0_46 = arith.constant 0 : index
    %68 = vector.load %arg10[%c0_45, %c0_46] : memref<16x128xf32, #tpu.memory_space<vmem>>, vector<16x128xf32>
    tpu.vector_store %arg10[%c0_45, %c0_46], %67 {strides = array<i32>} : memref<16x128xf32, #tpu.memory_space<vmem>>, vector<16x128xf32>,
    return
  }
  func.func @transform_0(%arg0: i32) -> (i32, i32) {
    %c0_i32 = arith.constant 0 : i32
    %c0_i32_0 = arith.constant 0 : i32
    %c0_i32_1 = arith.constant 0 : i32
    return %c0_i32, %c0_i32_0 : i32, i32
  }
  func.func @transform_1(%arg0: i32) -> (i32, i32) {
    %c0_i32 = arith.constant 0 : i32
    %c0_i32_0 = arith.constant 0 : i32
    %c0_i32_1 = arith.constant 0 : i32
    return %c0_i32, %c0_i32_0 : i32, i32
  }
  func.func @transform_2(%arg0: i32) -> (i32, i32) {
    %c0_i32 = arith.constant 0 : i32
    %c0_i32_0 = arith.constant 0 : i32
    %c0_i32_1 = arith.constant 0 : i32
    return %c0_i32, %c0_i32_0 : i32, i32
  }
  func.func @transform_3(%arg0: i32) -> (i32, i32) {
    %c0_i32 = arith.constant 0 : i32
    %c0_i32_0 = arith.constant 0 : i32
    %c0_i32_1 = arith.constant 0 : i32
    return %c0_i32, %c0_i32_0 : i32, i32
  }
  func.func @transform_4(%arg0: i32) -> (i32, i32) {
    %c0_i32 = arith.constant 0 : i32
    %c0_i32_0 = arith.constant 0 : i32
    %c0_i32_1 = arith.constant 0 : i32
    return %c0_i32, %c0_i32_0 : i32, i32
  }
  func.func @transform_5(%arg0: i32) -> (i32, i32) {
    %c0_i32 = arith.constant 0 : i32
    %c0_i32_0 = arith.constant 0 : i32
    %c0_i32_1 = arith.constant 0 : i32
    return %c0_i32, %c0_i32_0 : i32, i32
  }
  func.func @transform_6(%arg0: i32) -> (i32, i32) {
    %c0_i32 = arith.constant 0 : i32
    %c0_i32_0 = arith.constant 0 : i32
    %c0_i32_1 = arith.constant 0 : i32
    return %c0_i32, %c0_i32_0 : i32, i32
  }
  func.func @transform_7(%arg0: i32) -> (i32, i32) {
    %c0_i32 = arith.constant 0 : i32
    %c0_i32_0 = arith.constant 0 : i32
    %c0_i32_1 = arith.constant 0 : i32
    return %c0_i32, %c0_i32_0 : i32, i32
  }
  func.func @transform_8(%arg0: i32) -> (i32, i32) {
    %c0_i32 = arith.constant 0 : i32
    %c0_i32_0 = arith.constant 0 : i32
    %c0_i32_1 = arith.constant 0 : i32
    return %c0_i32, %c0_i32_0 : i32, i32
  }
  func.func @transform_9(%arg0: i32) -> (i32, i32) {
    %c0_i32 = arith.constant 0 : i32
    %c0_i32_0 = arith.constant 0 : i32
    %c0_i32_1 = arith.constant 0 : i32
    return %c0_i32, %c0_i32_0 : i32, i32
  }
}

</mosaic_0001>

<llo_original>
// kernel: _isub_impl.1
$region0: #{_isub_impl.1}
  #allocation0 [shape = 'u32[]', space=smem, size = 0x4, offset = 0x4, fixed_abs, tag = 'smem constant byte address 0x4 - core index']
  #allocation1 [shape = 'u32[144,128]{1,0:T(1,128)}', space=vmem, size = 0x12000, scoped, tag = 'internal scratch']
  %s0 = inlined_call_operand.vmem [shape: f32[16,32], index: 0, kind: input, shape index: {}]
  %s1 = inlined_call_operand.vmem [shape: f32[16,128], index: 1, kind: input, shape index: {}]
  %s2 = inlined_call_operand.vmem [shape: f32[16,128], index: 2, kind: input, shape index: {}]
  %s3 = inlined_call_operand.vmem [shape: f32[16,16], index: 3, kind: input, shape index: {}]
  %s4 = inlined_call_operand.vmem [shape: f32[16,16], index: 4, kind: input, shape index: {}]
  %s5 = inlined_call_operand.vmem [shape: f32[128,128], index: 5, kind: input, shape index: {}]
  %s6 = inlined_call_operand.vmem [shape: f32[128,128], index: 6, kind: input, shape index: {}]
  %s7 = inlined_call_operand.vmem [shape: f32[32,128], index: 7, kind: input, shape index: {}]
  %s8 = inlined_call_operand.vmem [shape: f32[32,128], index: 8, kind: input, shape index: {}]
  %s9 = inlined_call_operand.vmem [shape: f32[16,128], index: 9, kind: output, shape index: {}]
  %s10 = sld [smem:[#allocation0]]
  $region46: #{_isub_impl.1} parent=0
    _
  %s12 = ssub.s32 1, %s10
  %s13 = scalar_select 0, %s12, %s10
  // Predicated region
  $region2: #{_isub_impl.1} parent=0 // pred_check
    _
  $region3: #{_isub_impl.1} parent=0 // pred_check_branch
    %15 = sbr.rel (0) target = $region5
  $region4: #{_isub_impl.1} parent=0 // pred_region
    _
  $region5: #{_isub_impl.1} parent=0 // pred_fallthru
    _
  // Predicated region
  $region6: #{_isub_impl.1} parent=0 // pred_check
    _
  $region7: #{_isub_impl.1} parent=0 // pred_check_branch
    %17 = sbr.rel (0) target = $region9
  $region8: #{_isub_impl.1} parent=0 // pred_region
    _
  $region9: #{_isub_impl.1} parent=0 // pred_fallthru
    _
  // Predicated region
  $region10: #{_isub_impl.1} parent=0 // pred_check
    _
  $region11: #{_isub_impl.1} parent=0 // pred_check_branch
    %19 = sbr.rel (0) target = $region13
  $region12: #{_isub_impl.1} parent=0 // pred_region
    _
  $region13: #{_isub_impl.1} parent=0 // pred_fallthru
    _
  // Predicated region
  $region14: #{_isub_impl.1} parent=0 // pred_check
    _
  $region15: #{_isub_impl.1} parent=0 // pred_check_branch
    %21 = sbr.rel (0) target = $region17
  $region16: #{_isub_impl.1} parent=0 // pred_region
    _
  $region17: #{_isub_impl.1} parent=0 // pred_fallthru
    _
  // Predicated region
  $region18: #{_isub_impl.1} parent=0 // pred_check
    _
  $region19: #{_isub_impl.1} parent=0 // pred_check_branch
    %23 = sbr.rel (0) target = $region21
  $region20: #{_isub_impl.1} parent=0 // pred_region
    _
  $region21: #{_isub_impl.1} parent=0 // pred_fallthru
    _
  // Predicated region
  $region22: #{_isub_impl.1} parent=0 // pred_check
    _
  $region23: #{_isub_impl.1} parent=0 // pred_check_branch
    %25 = sbr.rel (0) target = $region25
  $region24: #{_isub_impl.1} parent=0 // pred_region
    _
  $region25: #{_isub_impl.1} parent=0 // pred_fallthru
    _
  // Predicated region
  $region26: #{_isub_impl.1} parent=0 // pred_check
    _
  $region27: #{_isub_impl.1} parent=0 // pred_check_branch
    %27 = sbr.rel (0) target = $region29
  $region28: #{_isub_impl.1} parent=0 // pred_region
    _
  $region29: #{_isub_impl.1} parent=0 // pred_fallthru
    _
  // Predicated region
  $region30: #{_isub_impl.1} parent=0 // pred_check
    _
  $region31: #{_isub_impl.1} parent=0 // pred_check_branch
    %29 = sbr.rel (0) target = $region33
  $region32: #{_isub_impl.1} parent=0 // pred_region
    _
  $region33: #{_isub_impl.1} parent=0 // pred_fallthru
    _
  // Predicated region
  $region34: #{_isub_impl.1} parent=0 // pred_check
    _
  $region35: #{_isub_impl.1} parent=0 // pred_check_branch
    %31 = sbr.rel (0) target = $region37
  $region36: #{_isub_impl.1} parent=0 // pred_region
    _
  $region37: #{_isub_impl.1} parent=0 // pred_fallthru
    _
  %v32 = vld [vmem:[%s3] sm:$0xff]
  %v33 = vld [vmem:[%s3 + $0x8] sm:$0xff]
  %v34 = vld [vmem:[%s4] sm:$0xff]
  %v35 = vld [vmem:[%s4 + $0x8] sm:$0xff]
  %v36 = vld [vmem:[%s5] sm:$0xff]
  %v37 = vld [vmem:[%s5 + $0x8] sm:$0xff]
  %v38 = vld [vmem:[%s5 + $0x10] sm:$0xff]
  %v39 = vld [vmem:[%s5 + $0x18] sm:$0xff]
  %v40 = vld [vmem:[%s5 + $0x20] sm:$0xff]
  %v41 = vld [vmem:[%s5 + $0x28] sm:$0xff]
  %v42 = vld [vmem:[%s5 + $0x30] sm:$0xff]
  %v43 = vld [vmem:[%s5 + $0x38] sm:$0xff]
  %v44 = vld [vmem:[%s5 + $0x40] sm:$0xff]
  %v45 = vld [vmem:[%s5 + $0x48] sm:$0xff]
  %v46 = vld [vmem:[%s5 + $0x50] sm:$0xff]
  %v47 = vld [vmem:[%s5 + $0x58] sm:$0xff]
  %v48 = vld [vmem:[%s5 + $0x60] sm:$0xff]
  %v49 = vld [vmem:[%s5 + $0x68] sm:$0xff]
  %v50 = vld [vmem:[%s5 + $0x70] sm:$0xff]
  %v51 = vld [vmem:[%s5 + $0x78] sm:$0xff]
  %v52 = vld [vmem:[%s6] sm:$0xff]
  %v53 = vld [vmem:[%s6 + $0x8] sm:$0xff]
  %v54 = vld [vmem:[%s6 + $0x10] sm:$0xff]
  %v55 = vld [vmem:[%s6 + $0x18] sm:$0xff]
  %v56 = vld [vmem:[%s6 + $0x20] sm:$0xff]
  %v57 = vld [vmem:[%s6 + $0x28] sm:$0xff]
  %v58 = vld [vmem:[%s6 + $0x30] sm:$0xff]
  %v59 = vld [vmem:[%s6 + $0x38] sm:$0xff]
  %v60 = vld [vmem:[%s6 + $0x40] sm:$0xff]
  %v61 = vld [vmem:[%s6 + $0x48] sm:$0xff]
  %v62 = vld [vmem:[%s6 + $0x50] sm:$0xff]
  %v63 = vld [vmem:[%s6 + $0x58] sm:$0xff]
  %v64 = vld [vmem:[%s6 + $0x60] sm:$0xff]
  %v65 = vld [vmem:[%s6 + $0x68] sm:$0xff]
  %v66 = vld [vmem:[%s6 + $0x70] sm:$0xff]
  %v67 = vld [vmem:[%s6 + $0x78] sm:$0xff]
  %v68 = vld [vmem:[%s7] sm:$0xff]
  %v69 = vld [vmem:[%s7 + $0x8] sm:$0xff]
  %v70 = vld [vmem:[%s7 + $0x10] sm:$0xff]
  %v71 = vld [vmem:[%s7 + $0x18] sm:$0xff]
  %v72 = vld [vmem:[%s8] sm:$0xff]
  %v73 = vld [vmem:[%s8 + $0x8] sm:$0xff]
  %v74 = vld [vmem:[%s8 + $0x10] sm:$0xff]
  %v75 = vld [vmem:[%s8 + $0x18] sm:$0xff]
  %v76 = vld [vmem:[%s0] sm:$0xff]
  %v77 = vld [vmem:[%s0 + $0x8] sm:$0xff]
  %vm78 = vcmask 130048
  %v80 = vsel %vm78, %v32, 0
  %v83 = vsel %vm78, %v33, 0
  %85 = vmatprep.subr.mxu0 0.0
  %86 = vmatpush1.msra.mxu0 %v76
  %87 = vmatprep.subr.mxu0 0.0
  %88 = vmatpush1.msra.mxu0 %v77
  %89 = vmatprep.subr.mxu0 0.0
  %90 = vmatpush1.msra.mxu0 0.0
  %91 = vmatprep.subr.mxu0 0.0
  %92 = vmatpush1.msra.mxu0 0.0
  %93 = vmatprep.subr.mxu0 0.0
  %94 = vmatpush1.msra.mxu0 0.0
  %95 = vmatprep.subr.mxu0 0.0
  %96 = vmatpush1.msra.mxu0 0.0
  %97 = vmatprep.subr.mxu0 0.0
  %98 = vmatpush1.msra.mxu0 0.0
  %99 = vmatprep.subr.mxu0 0.0
  %100 = vmatpush1.msra.mxu0 0.0
  %101 = vmatprep.subr.mxu0 0.0
  %102 = vmatpush1.msra.mxu0 0.0
  %103 = vmatprep.subr.mxu0 0.0
  %104 = vmatpush1.msra.mxu0 0.0
  %105 = vmatprep.subr.mxu0 0.0
  %106 = vmatpush1.msra.mxu0 0.0
  %107 = vmatprep.subr.mxu0 0.0
  %108 = vmatpush1.msra.mxu0 0.0
  %109 = vmatprep.subr.mxu0 0.0
  %110 = vmatpush1.msra.mxu0 0.0
  %111 = vmatprep.subr.mxu0 0.0
  %112 = vmatpush1.msra.mxu0 0.0
  %113 = vmatprep.subr.mxu0 0.0
  %114 = vmatpush1.msra.mxu0 0.0
  %115 = vmatprep.subr.mxu0 0.0
  %116 = vmatpush1.msra.mxu0 0.0
  %117 = vmatprep.subr.mxu0 0.0
  %118 = vmatpush1.msra.mxu0 0.0
  %119 = vmatprep.subr.mxu0 0.0
  %120 = vmatpush1.msra.mxu0 0.0
  %121 = vmatprep.subr.mxu0 0.0
  %122 = vmatpush1.msra.mxu0 0.0
  %123 = vmatprep.subr.mxu0 0.0
  %124 = vmatpush1.msra.mxu0 0.0
  %125 = vmatprep.subr.mxu0 0.0
  %126 = vmatpush1.msra.mxu0 0.0
  %127 = vmatprep.subr.mxu0 0.0
  %128 = vmatpush1.msra.mxu0 0.0
  %129 = vmatprep.subr.mxu0 0.0
  %130 = vmatpush1.msra.mxu0 0.0
  %131 = vmatprep.subr.mxu0 0.0
  %132 = vmatpush1.msra.mxu0 0.0
  %133 = vmatprep.subr.mxu0 0.0
  %134 = vmatpush1.msra.mxu0 0.0
  %135 = vmatprep.subr.mxu0 0.0
  %136 = vmatpush1.msra.mxu0 0.0
  %137 = vmatprep.subr.mxu0 0.0
  %138 = vmatpush1.msra.mxu0 0.0
  %139 = vmatprep.subr.mxu0 0.0
  %140 = vmatpush1.msra.mxu0 0.0
  %141 = vmatprep.subr.mxu0 0.0
  %142 = vmatpush1.msra.mxu0 0.0
  %143 = vmatprep.subr.mxu0 0.0
  %144 = vmatpush1.msra.mxu0 0.0
  %145 = vmatprep.subr.mxu0 0.0
  %146 = vmatpush1.msra.mxu0 0.0
  %147 = vmatprep.subr.mxu0 0.0
  %148 = vmatpush1.msra.mxu0 0.0
  %149 = vmatprep.mubr.f32.mxu0 0.0
  %150 = vmatmul.mubr.f32.gmra.mrb[0].mxu0 %v80
  %v151 = vpop.f32.mrb[0].mxu0
  %v152 = vadd.f32 0.0, %v151
  %v153 = vpop.f32.mrb[0].mxu0
  %154 = vmatprep.mubr.f32.mxu0 0.0
  %155 = vmatmul.mubr.f32.gmra.mrb[0].mxu0 %v83
  %v156 = vpop.f32.mrb[0].mxu0
  %v157 = vadd.f32 0.0, %v156
  %v158 = vpop.f32.mrb[0].mxu0
  %159 = vdwg.mxu0
  %v161 = vsel %vm78, %v34, 0
  %v164 = vsel %vm78, %v35, 0
  %166 = vmatprep.subr.mxu0 0.0
  %167 = vmatpush1.msra.mxu0 %v76
  %168 = vmatprep.subr.mxu0 0.0
  %169 = vmatpush1.msra.mxu0 %v77
  %170 = vmatprep.subr.mxu0 0.0
  %171 = vmatpush1.msra.mxu0 0.0
  %172 = vmatprep.subr.mxu0 0.0
  %173 = vmatpush1.msra.mxu0 0.0
  %174 = vmatprep.subr.mxu0 0.0
  %175 = vmatpush1.msra.mxu0 0.0
  %176 = vmatprep.subr.mxu0 0.0
  %177 = vmatpush1.msra.mxu0 0.0
  %178 = vmatprep.subr.mxu0 0.0
  %179 = vmatpush1.msra.mxu0 0.0
  %180 = vmatprep.subr.mxu0 0.0
  %181 = vmatpush1.msra.mxu0 0.0
  %182 = vmatprep.subr.mxu0 0.0
  %183 = vmatpush1.msra.mxu0 0.0
  %184 = vmatprep.subr.mxu0 0.0
  %185 = vmatpush1.msra.mxu0 0.0
  %186 = vmatprep.subr.mxu0 0.0
  %187 = vmatpush1.msra.mxu0 0.0
  %188 = vmatprep.subr.mxu0 0.0
  %189 = vmatpush1.msra.mxu0 0.0
  %190 = vmatprep.subr.mxu0 0.0
  %191 = vmatpush1.msra.mxu0 0.0
  %192 = vmatprep.subr.mxu0 0.0
  %193 = vmatpush1.msra.mxu0 0.0
  %194 = vmatprep.subr.mxu0 0.0
  %195 = vmatpush1.msra.mxu0 0.0
  %196 = vmatprep.subr.mxu0 0.0
  %197 = vmatpush1.msra.mxu0 0.0
  %198 = vmatprep.subr.mxu0 0.0
  %199 = vmatpush1.msra.mxu0 0.0
  %200 = vmatprep.subr.mxu0 0.0
  %201 = vmatpush1.msra.mxu0 0.0
  %202 = vmatprep.subr.mxu0 0.0
  %203 = vmatpush1.msra.mxu0 0.0
  %204 = vmatprep.subr.mxu0 0.0
  %205 = vmatpush1.msra.mxu0 0.0
  %206 = vmatprep.subr.mxu0 0.0
  %207 = vmatpush1.msra.mxu0 0.0
  %208 = vmatprep.subr.mxu0 0.0
  %209 = vmatpush1.msra.mxu0 0.0
  %210 = vmatprep.subr.mxu0 0.0
  %211 = vmatpush1.msra.mxu0 0.0
  %212 = vmatprep.subr.mxu0 0.0
  %213 = vmatpush1.msra.mxu0 0.0
  %214 = vmatprep.subr.mxu0 0.0
  %215 = vmatpush1.msra.mxu0 0.0
  %216 = vmatprep.subr.mxu0 0.0
  %217 = vmatpush1.msra.mxu0 0.0
  %218 = vmatprep.subr.mxu0 0.0
  %219 = vmatpush1.msra.mxu0 0.0
  %220 = vmatprep.subr.mxu0 0.0
  %221 = vmatpush1.msra.mxu0 0.0
  %222 = vmatprep.subr.mxu0 0.0
  %223 = vmatpush1.msra.mxu0 0.0
  %224 = vmatprep.subr.mxu0 0.0
  %225 = vmatpush1.msra.mxu0 0.0
  %226 = vmatprep.subr.mxu0 0.0
  %227 = vmatpush1.msra.mxu0 0.0
  %228 = vmatprep.subr.mxu0 0.0
  %229 = vmatpush1.msra.mxu0 0.0
  %230 = vmatprep.mubr.f32.mxu0 0.0
  %231 = vmatmul.mubr.f32.gmra.mrb[0].mxu0 %v161
  %v232 = vpop.f32.mrb[0].mxu0
  %v233 = vadd.f32 0.0, %v232
  %v234 = vpop.f32.mrb[0].mxu0
  %235 = vmatprep.mubr.f32.mxu0 0.0
  %236 = vmatmul.mubr.f32.gmra.mrb[0].mxu0 %v164
  %v237 = vpop.f32.mrb[0].mxu0
  %v238 = vadd.f32 0.0, %v237
  %v239 = vpop.f32.mrb[0].mxu0
  %240 = vdwg.mxu0
  %vm241 = vcmask 261120
  %v243 = vsel %vm241, %v152, 0
  %v246 = vsel %vm241, %v157, 0
  %248 = vmatprep.subr.mxu0 0.0
  %249 = vmatpush1.msra.mxu0 %v68
  %250 = vmatprep.subr.mxu0 0.0
  %251 = vmatpush1.msra.mxu0 %v69
  %252 = vmatprep.subr.mxu0 0.0
  %253 = vmatpush1.msra.mxu0 %v70
  %254 = vmatprep.subr.mxu0 0.0
  %255 = vmatpush1.msra.mxu0 %v71
  %256 = vmatprep.subr.mxu0 0.0
  %257 = vmatpush1.msra.mxu0 0.0
  %258 = vmatprep.subr.mxu0 0.0
  %259 = vmatpush1.msra.mxu0 0.0
  %260 = vmatprep.subr.mxu0 0.0
  %261 = vmatpush1.msra.mxu0 0.0
  %262 = vmatprep.subr.mxu0 0.0
  %263 = vmatpush1.msra.mxu0 0.0
  %264 = vmatprep.subr.mxu0 0.0
  %265 = vmatpush1.msra.mxu0 0.0
  %266 = vmatprep.subr.mxu0 0.0
  %267 = vmatpush1.msra.mxu0 0.0
  %268 = vmatprep.subr.mxu0 0.0
  %269 = vmatpush1.msra.mxu0 0.0
  %270 = vmatprep.subr.mxu0 0.0
  %271 = vmatpush1.msra.mxu0 0.0
  %272 = vmatprep.subr.mxu0 0.0
  %273 = vmatpush1.msra.mxu0 0.0
  %274 = vmatprep.subr.mxu0 0.0
  %275 = vmatpush1.msra.mxu0 0.0
  %276 = vmatprep.subr.mxu0 0.0
  %277 = vmatpush1.msra.mxu0 0.0
  %278 = vmatprep.subr.mxu0 0.0
  %279 = vmatpush1.msra.mxu0 0.0
  %280 = vmatprep.subr.mxu0 0.0
  %281 = vmatpush1.msra.mxu0 0.0
  %282 = vmatprep.subr.mxu0 0.0
  %283 = vmatpush1.msra.mxu0 0.0
  %284 = vmatprep.subr.mxu0 0.0
  %285 = vmatpush1.msra.mxu0 0.0
  %286 = vmatprep.subr.mxu0 0.0
  %287 = vmatpush1.msra.mxu0 0.0
  %288 = vmatprep.subr.mxu0 0.0
  %289 = vmatpush1.msra.mxu0 0.0
  %290 = vmatprep.subr.mxu0 0.0
  %291 = vmatpush1.msra.mxu0 0.0
  %292 = vmatprep.subr.mxu0 0.0
  %293 = vmatpush1.msra.mxu0 0.0
  %294 = vmatprep.subr.mxu0 0.0
  %295 = vmatpush1.msra.mxu0 0.0
  %296 = vmatprep.subr.mxu0 0.0
  %297 = vmatpush1.msra.mxu0 0.0
  %298 = vmatprep.subr.mxu0 0.0
  %299 = vmatpush1.msra.mxu0 0.0
  %300 = vmatprep.subr.mxu0 0.0
  %301 = vmatpush1.msra.mxu0 0.0
  %302 = vmatprep.subr.mxu0 0.0
  %303 = vmatpush1.msra.mxu0 0.0
  %304 = vmatprep.subr.mxu0 0.0
  %305 = vmatpush1.msra.mxu0 0.0
  %306 = vmatprep.subr.mxu0 0.0
  %307 = vmatpush1.msra.mxu0 0.0
  %308 = vmatprep.subr.mxu0 0.0
  %309 = vmatpush1.msra.mxu0 0.0
  %310 = vmatprep.subr.mxu0 0.0
  %311 = vmatpush1.msra.mxu0 0.0
  %312 = vmatprep.mubr.f32.mxu0 0.0
  %313 = vmatmul.mubr.f32.gmra.mrb[0].mxu0 %v243
  %v314 = vpop.f32.mrb[0].mxu0
  %v315 = vadd.f32 0.0, %v314
  %v316 = vpop.f32.mrb[0].mxu0
  %317 = vmatprep.mubr.f32.mxu0 0.0
  %318 = vmatmul.mubr.f32.gmra.mrb[0].mxu0 %v246
  %v319 = vpop.f32.mrb[0].mxu0
  %v320 = vadd.f32 0.0, %v319
  %v321 = vpop.f32.mrb[0].mxu0
  %322 = vdwg.mxu0
  %v324 = vsel %vm241, %v233, 0
  %v327 = vsel %vm241, %v238, 0
  %329 = vmatprep.subr.mxu0 0.0
  %330 = vmatpush1.msra.mxu0 %v72
  %331 = vmatprep.subr.mxu0 0.0
  %332 = vmatpush1.msra.mxu0 %v73
  %333 = vmatprep.subr.mxu0 0.0
  %334 = vmatpush1.msra.mxu0 %v74
  %335 = vmatprep.subr.mxu0 0.0
  %336 = vmatpush1.msra.mxu0 %v75
  %337 = vmatprep.subr.mxu0 0.0
  %338 = vmatpush1.msra.mxu0 0.0
  %339 = vmatprep.subr.mxu0 0.0
  %340 = vmatpush1.msra.mxu0 0.0
  %341 = vmatprep.subr.mxu0 0.0
  %342 = vmatpush1.msra.mxu0 0.0
  %343 = vmatprep.subr.mxu0 0.0
  %344 = vmatpush1.msra.mxu0 0.0
  %345 = vmatprep.subr.mxu0 0.0
  %346 = vmatpush1.msra.mxu0 0.0
  %347 = vmatprep.subr.mxu0 0.0
  %348 = vmatpush1.msra.mxu0 0.0
  %349 = vmatprep.subr.mxu0 0.0
  %350 = vmatpush1.msra.mxu0 0.0
  %351 = vmatprep.subr.mxu0 0.0
  %352 = vmatpush1.msra.mxu0 0.0
  %353 = vmatprep.subr.mxu0 0.0
  %354 = vmatpush1.msra.mxu0 0.0
  %355 = vmatprep.subr.mxu0 0.0
  %356 = vmatpush1.msra.mxu0 0.0
  %357 = vmatprep.subr.mxu0 0.0
  %358 = vmatpush1.msra.mxu0 0.0
  %359 = vmatprep.subr.mxu0 0.0
  %360 = vmatpush1.msra.mxu0 0.0
  %361 = vmatprep.subr.mxu0 0.0
  %362 = vmatpush1.msra.mxu0 0.0
  %363 = vmatprep.subr.mxu0 0.0
  %364 = vmatpush1.msra.mxu0 0.0
  %365 = vmatprep.subr.mxu0 0.0
  %366 = vmatpush1.msra.mxu0 0.0
  %367 = vmatprep.subr.mxu0 0.0
  %368 = vmatpush1.msra.mxu0 0.0
  %369 = vmatprep.subr.mxu0 0.0
  %370 = vmatpush1.msra.mxu0 0.0
  %371 = vmatprep.subr.mxu0 0.0
  %372 = vmatpush1.msra.mxu0 0.0
  %373 = vmatprep.subr.mxu0 0.0
  %374 = vmatpush1.msra.mxu0 0.0
  %375 = vmatprep.subr.mxu0 0.0
  %376 = vmatpush1.msra.mxu0 0.0
  %377 = vmatprep.subr.mxu0 0.0
  %378 = vmatpush1.msra.mxu0 0.0
  %379 = vmatprep.subr.mxu0 0.0
  %380 = vmatpush1.msra.mxu0 0.0
  %381 = vmatprep.subr.mxu0 0.0
  %382 = vmatpush1.msra.mxu0 0.0
  %383 = vmatprep.subr.mxu0 0.0
  %384 = vmatpush1.msra.mxu0 0.0
  %385 = vmatprep.subr.mxu0 0.0
  %386 = vmatpush1.msra.mxu0 0.0
  %387 = vmatprep.subr.mxu0 0.0
  %388 = vmatpush1.msra.mxu0 0.0
  %389 = vmatprep.subr.mxu0 0.0
  %390 = vmatpush1.msra.mxu0 0.0
  %391 = vmatprep.subr.mxu0 0.0
  %392 = vmatpush1.msra.mxu0 0.0
  %393 = vmatprep.mubr.f32.mxu0 0.0
  %394 = vmatmul.mubr.f32.gmra.mrb[0].mxu0 %v324
  %v395 = vpop.f32.mrb[0].mxu0
  %v396 = vadd.f32 0.0, %v395
  %v397 = vpop.f32.mrb[0].mxu0
  %398 = vmatprep.mubr.f32.mxu0 0.0
  %399 = vmatmul.mubr.f32.gmra.mrb[0].mxu0 %v327
  %v400 = vpop.f32.mrb[0].mxu0
  %v401 = vadd.f32 0.0, %v400
  %v402 = vpop.f32.mrb[0].mxu0
  %403 = vdwg.mxu0
  %v404 = vsub.f32 %v315, %v396
  %v405 = vsub.f32 %v320, %v401
  %406 = vmatprep.subr.mxu0 0.0
  %407 = vmatpush1.msra.mxu0 %v68
  %408 = vmatprep.subr.mxu0 0.0
  %409 = vmatpush1.msra.mxu0 %v69
  %410 = vmatprep.subr.mxu0 0.0
  %411 = vmatpush1.msra.mxu0 %v70
  %412 = vmatprep.subr.mxu0 0.0
  %413 = vmatpush1.msra.mxu0 %v71
  %414 = vmatprep.subr.mxu0 0.0
  %415 = vmatpush1.msra.mxu0 0.0
  %416 = vmatprep.subr.mxu0 0.0
  %417 = vmatpush1.msra.mxu0 0.0
  %418 = vmatprep.subr.mxu0 0.0
  %419 = vmatpush1.msra.mxu0 0.0
  %420 = vmatprep.subr.mxu0 0.0
  %421 = vmatpush1.msra.mxu0 0.0
  %422 = vmatprep.subr.mxu0 0.0
  %423 = vmatpush1.msra.mxu0 0.0
  %424 = vmatprep.subr.mxu0 0.0
  %425 = vmatpush1.msra.mxu0 0.0
  %426 = vmatprep.subr.mxu0 0.0
  %427 = vmatpush1.msra.mxu0 0.0
  %428 = vmatprep.subr.mxu0 0.0
  %429 = vmatpush1.msra.mxu0 0.0
  %430 = vmatprep.subr.mxu0 0.0
  %431 = vmatpush1.msra.mxu0 0.0
  %432 = vmatprep.subr.mxu0 0.0
  %433 = vmatpush1.msra.mxu0 0.0
  %434 = vmatprep.subr.mxu0 0.0
  %435 = vmatpush1.msra.mxu0 0.0
  %436 = vmatprep.subr.mxu0 0.0
  %437 = vmatpush1.msra.mxu0 0.0
  %438 = vmatprep.subr.mxu0 0.0
  %439 = vmatpush1.msra.mxu0 0.0
  %440 = vmatprep.subr.mxu0 0.0
  %441 = vmatpush1.msra.mxu0 0.0
  %442 = vmatprep.subr.mxu0 0.0
  %443 = vmatpush1.msra.mxu0 0.0
  %444 = vmatprep.subr.mxu0 0.0
  %445 = vmatpush1.msra.mxu0 0.0
  %446 = vmatprep.subr.mxu0 0.0
  %447 = vmatpush1.msra.mxu0 0.0
  %448 = vmatprep.subr.mxu0 0.0
  %449 = vmatpush1.msra.mxu0 0.0
  %450 = vmatprep.subr.mxu0 0.0
  %451 = vmatpush1.msra.mxu0 0.0
  %452 = vmatprep.subr.mxu0 0.0
  %453 = vmatpush1.msra.mxu0 0.0
  %454 = vmatprep.subr.mxu0 0.0
  %455 = vmatpush1.msra.mxu0 0.0
  %456 = vmatprep.subr.mxu0 0.0
  %457 = vmatpush1.msra.mxu0 0.0
  %458 = vmatprep.subr.mxu0 0.0
  %459 = vmatpush1.msra.mxu0 0.0
  %460 = vmatprep.subr.mxu0 0.0
  %461 = vmatpush1.msra.mxu0 0.0
  %462 = vmatprep.subr.mxu0 0.0
  %463 = vmatpush1.msra.mxu0 0.0
  %464 = vmatprep.subr.mxu0 0.0
  %465 = vmatpush1.msra.mxu0 0.0
  %466 = vmatprep.subr.mxu0 0.0
  %467 = vmatpush1.msra.mxu0 0.0
  %468 = vmatprep.subr.mxu0 0.0
  %469 = vmatpush1.msra.mxu0 0.0
  %470 = vmatprep.mubr.f32.mxu0 0.0
  %471 = vmatmul.mubr.f32.gmra.mrb[0].mxu0 %v324
  %v472 = vpop.f32.mrb[0].mxu0
  %v473 = vadd.f32 0.0, %v472
  %v474 = vpop.f32.mrb[0].mxu0
  %475 = vmatprep.mubr.f32.mxu0 0.0
  %476 = vmatmul.mubr.f32.gmra.mrb[0].mxu0 %v327
  %v477 = vpop.f32.mrb[0].mxu0
  %v478 = vadd.f32 0.0, %v477
  %v479 = vpop.f32.mrb[0].mxu0
  %480 = vdwg.mxu0
  %481 = vmatprep.subr.mxu0 0.0
  %482 = vmatpush1.msra.mxu0 %v72
  %483 = vmatprep.subr.mxu0 0.0
  %484 = vmatpush1.msra.mxu0 %v73
  %485 = vmatprep.subr.mxu0 0.0
  %486 = vmatpush1.msra.mxu0 %v74
  %487 = vmatprep.subr.mxu0 0.0
  %488 = vmatpush1.msra.mxu0 %v75
  %489 = vmatprep.subr.mxu0 0.0
  %490 = vmatpush1.msra.mxu0 0.0
  %491 = vmatprep.subr.mxu0 0.0
  %492 = vmatpush1.msra.mxu0 0.0
  %493 = vmatprep.subr.mxu0 0.0
  %494 = vmatpush1.msra.mxu0 0.0
  %495 = vmatprep.subr.mxu0 0.0
  %496 = vmatpush1.msra.mxu0 0.0
  %497 = vmatprep.subr.mxu0 0.0
  %498 = vmatpush1.msra.mxu0 0.0
  %499 = vmatprep.subr.mxu0 0.0
  %500 = vmatpush1.msra.mxu0 0.0
  %501 = vmatprep.subr.mxu0 0.0
  %502 = vmatpush1.msra.mxu0 0.0
  %503 = vmatprep.subr.mxu0 0.0
  %504 = vmatpush1.msra.mxu0 0.0
  %505 = vmatprep.subr.mxu0 0.0
  %506 = vmatpush1.msra.mxu0 0.0
  %507 = vmatprep.subr.mxu0 0.0
  %508 = vmatpush1.msra.mxu0 0.0
  %509 = vmatprep.subr.mxu0 0.0
  %510 = vmatpush1.msra.mxu0 0.0
  %511 = vmatprep.subr.mxu0 0.0
  %512 = vmatpush1.msra.mxu0 0.0
  %513 = vmatprep.subr.mxu0 0.0
  %514 = vmatpush1.msra.mxu0 0.0
  %515 = vmatprep.subr.mxu0 0.0
  %516 = vmatpush1.msra.mxu0 0.0
  %517 = vmatprep.subr.mxu0 0.0
  %518 = vmatpush1.msra.mxu0 0.0
  %519 = vmatprep.subr.mxu0 0.0
  %520 = vmatpush1.msra.mxu0 0.0
  %521 = vmatprep.subr.mxu0 0.0
  %522 = vmatpush1.msra.mxu0 0.0
  %523 = vmatprep.subr.mxu0 0.0
  %524 = vmatpush1.msra.mxu0 0.0
  %525 = vmatprep.subr.mxu0 0.0
  %526 = vmatpush1.msra.mxu0 0.0
  %527 = vmatprep.subr.mxu0 0.0
  %528 = vmatpush1.msra.mxu0 0.0
  %529 = vmatprep.subr.mxu0 0.0
  %530 = vmatpush1.msra.mxu0 0.0
  %531 = vmatprep.subr.mxu0 0.0
  %532 = vmatpush1.msra.mxu0 0.0
  %533 = vmatprep.subr.mxu0 0.0
  %534 = vmatpush1.msra.mxu0 0.0
  %535 = vmatprep.subr.mxu0 0.0
  %536 = vmatpush1.msra.mxu0 0.0
  %537 = vmatprep.subr.mxu0 0.0
  %538 = vmatpush1.msra.mxu0 0.0
  %539 = vmatprep.subr.mxu0 0.0
  %540 = vmatpush1.msra.mxu0 0.0
  %541 = vmatprep.subr.mxu0 0.0
  %542 = vmatpush1.msra.mxu0 0.0
  %543 = vmatprep.subr.mxu0 0.0
  %544 = vmatpush1.msra.mxu0 0.0
  %545 = vmatprep.mubr.f32.mxu0 0.0
  %546 = vmatmul.mubr.f32.gmra.mrb[0].mxu0 %v243
  %v547 = vpop.f32.mrb[0].mxu0
  %v548 = vadd.f32 %v473, %v547
  %v549 = vpop.f32.mrb[0].mxu0
  %550 = vmatprep.mubr.f32.mxu0 0.0
  %551 = vmatmul.mubr.f32.gmra.mrb[0].mxu0 %v246
  %v552 = vpop.f32.mrb[0].mxu0
  %v553 = vadd.f32 %v478, %v552
  %v554 = vpop.f32.mrb[0].mxu0
  %555 = vdwg.mxu0
  %v556 = vld [vmem:[%s1] sm:$0xff]
  %v557 = vld [vmem:[%s1 + $0x8] sm:$0xff]
  %558 = vmatprep.subr.mxu0 0.0
  %559 = vmatpush1.msra.mxu0 %v556
  %560 = vmatprep.subr.mxu0 0.0
  %561 = vmatpush1.msra.mxu0 %v557
  %562 = vmatprep.subr.mxu0 0.0
  %563 = vmatpush1.msra.mxu0 0.0
  %564 = vmatprep.subr.mxu0 0.0
  %565 = vmatpush1.msra.mxu0 0.0
  %566 = vmatprep.subr.mxu0 0.0
  %567 = vmatpush1.msra.mxu0 0.0
  %568 = vmatprep.subr.mxu0 0.0
  %569 = vmatpush1.msra.mxu0 0.0
  %570 = vmatprep.subr.mxu0 0.0
  %571 = vmatpush1.msra.mxu0 0.0
  %572 = vmatprep.subr.mxu0 0.0
  %573 = vmatpush1.msra.mxu0 0.0
  %574 = vmatprep.subr.mxu0 0.0
  %575 = vmatpush1.msra.mxu0 0.0
  %576 = vmatprep.subr.mxu0 0.0
  %577 = vmatpush1.msra.mxu0 0.0
  %578 = vmatprep.subr.mxu0 0.0
  %579 = vmatpush1.msra.mxu0 0.0
  %580 = vmatprep.subr.mxu0 0.0
  %581 = vmatpush1.msra.mxu0 0.0
  %582 = vmatprep.subr.mxu0 0.0
  %583 = vmatpush1.msra.mxu0 0.0
  %584 = vmatprep.subr.mxu0 0.0
  %585 = vmatpush1.msra.mxu0 0.0
  %586 = vmatprep.subr.mxu0 0.0
  %587 = vmatpush1.msra.mxu0 0.0
  %588 = vmatprep.subr.mxu0 0.0
  %589 = vmatpush1.msra.mxu0 0.0
  %590 = vmatprep.subr.mxu0 0.0
  %591 = vmatpush1.msra.mxu0 0.0
  %592 = vmatprep.subr.mxu0 0.0
  %593 = vmatpush1.msra.mxu0 0.0
  %594 = vmatprep.subr.mxu0 0.0
  %595 = vmatpush1.msra.mxu0 0.0
  %596 = vmatprep.subr.mxu0 0.0
  %597 = vmatpush1.msra.mxu0 0.0
  %598 = vmatprep.subr.mxu0 0.0
  %599 = vmatpush1.msra.mxu0 0.0
  %600 = vmatprep.subr.mxu0 0.0
  %601 = vmatpush1.msra.mxu0 0.0
  %602 = vmatprep.subr.mxu0 0.0
  %603 = vmatpush1.msra.mxu0 0.0
  %604 = vmatprep.subr.mxu0 0.0
  %605 = vmatpush1.msra.mxu0 0.0
  %606 = vmatprep.subr.mxu0 0.0
  %607 = vmatpush1.msra.mxu0 0.0
  %608 = vmatprep.subr.mxu0 0.0
  %609 = vmatpush1.msra.mxu0 0.0
  %610 = vmatprep.subr.mxu0 0.0
  %611 = vmatpush1.msra.mxu0 0.0
  %612 = vmatprep.subr.mxu0 0.0
  %613 = vmatpush1.msra.mxu0 0.0
  %614 = vmatprep.subr.mxu0 0.0
  %615 = vmatpush1.msra.mxu0 0.0
  %616 = vmatprep.subr.mxu0 0.0
  %617 = vmatpush1.msra.mxu0 0.0
  %618 = vmatprep.subr.mxu0 0.0
  %619 = vmatpush1.msra.mxu0 0.0
  %620 = vmatprep.subr.mxu0 0.0
  %621 = vmatpush1.msra.mxu0 0.0
  %622 = vmatprep.mubr.f32.mxu0 0.0
  %623 = vmatmul.mubr.f32.gmra.mrb[0].mxu0 %v80
  %v624 = vpop.f32.mrb[0].mxu0
  %v625 = vadd.f32 0.0, %v624
  %v626 = vpop.f32.mrb[0].mxu0
  %627 = vmatprep.mubr.f32.mxu0 0.0
  %628 = vmatmul.mubr.f32.gmra.mrb[0].mxu0 %v83
  %v629 = vpop.f32.mrb[0].mxu0
  %v630 = vadd.f32 0.0, %v629
  %v631 = vpop.f32.mrb[0].mxu0
  %632 = vdwg.mxu0
  %633 = vmatprep.subr.mxu0 0.0
  %634 = vmatpush1.msra.mxu0 %v556
  %635 = vmatprep.subr.mxu0 0.0
  %636 = vmatpush1.msra.mxu0 %v557
  %637 = vmatprep.subr.mxu0 0.0
  %638 = vmatpush1.msra.mxu0 0.0
  %639 = vmatprep.subr.mxu0 0.0
  %640 = vmatpush1.msra.mxu0 0.0
  %641 = vmatprep.subr.mxu0 0.0
  %642 = vmatpush1.msra.mxu0 0.0
  %643 = vmatprep.subr.mxu0 0.0
  %644 = vmatpush1.msra.mxu0 0.0
  %645 = vmatprep.subr.mxu0 0.0
  %646 = vmatpush1.msra.mxu0 0.0
  %647 = vmatprep.subr.mxu0 0.0
  %648 = vmatpush1.msra.mxu0 0.0
  %649 = vmatprep.subr.mxu0 0.0
  %650 = vmatpush1.msra.mxu0 0.0
  %651 = vmatprep.subr.mxu0 0.0
  %652 = vmatpush1.msra.mxu0 0.0
  %653 = vmatprep.subr.mxu0 0.0
  %654 = vmatpush1.msra.mxu0 0.0
  %655 = vmatprep.subr.mxu0 0.0
  %656 = vmatpush1.msra.mxu0 0.0
  %657 = vmatprep.subr.mxu0 0.0
  %658 = vmatpush1.msra.mxu0 0.0
  %659 = vmatprep.subr.mxu0 0.0
  %660 = vmatpush1.msra.mxu0 0.0
  %661 = vmatprep.subr.mxu0 0.0
  %662 = vmatpush1.msra.mxu0 0.0
  %663 = vmatprep.subr.mxu0 0.0
  %664 = vmatpush1.msra.mxu0 0.0
  %665 = vmatprep.subr.mxu0 0.0
  %666 = vmatpush1.msra.mxu0 0.0
  %667 = vmatprep.subr.mxu0 0.0
  %668 = vmatpush1.msra.mxu0 0.0
  %669 = vmatprep.subr.mxu0 0.0
  %670 = vmatpush1.msra.mxu0 0.0
  %671 = vmatprep.subr.mxu0 0.0
  %672 = vmatpush1.msra.mxu0 0.0
  %673 = vmatprep.subr.mxu0 0.0
  %674 = vmatpush1.msra.mxu0 0.0
  %675 = vmatprep.subr.mxu0 0.0
  %676 = vmatpush1.msra.mxu0 0.0
  %677 = vmatprep.subr.mxu0 0.0
  %678 = vmatpush1.msra.mxu0 0.0
  %679 = vmatprep.subr.mxu0 0.0
  %680 = vmatpush1.msra.mxu0 0.0
  %681 = vmatprep.subr.mxu0 0.0
  %682 = vmatpush1.msra.mxu0 0.0
  %683 = vmatprep.subr.mxu0 0.0
  %684 = vmatpush1.msra.mxu0 0.0
  %685 = vmatprep.subr.mxu0 0.0
  %686 = vmatpush1.msra.mxu0 0.0
  %687 = vmatprep.subr.mxu0 0.0
  %688 = vmatpush1.msra.mxu0 0.0
  %689 = vmatprep.subr.mxu0 0.0
  %690 = vmatpush1.msra.mxu0 0.0
  %691 = vmatprep.subr.mxu0 0.0
  %692 = vmatpush1.msra.mxu0 0.0
  %693 = vmatprep.subr.mxu0 0.0
  %694 = vmatpush1.msra.mxu0 0.0
  %695 = vmatprep.subr.mxu0 0.0
  %696 = vmatpush1.msra.mxu0 0.0
  %697 = vmatprep.mubr.f32.mxu0 0.0
  %698 = vmatmul.mubr.f32.gmra.mrb[0].mxu0 %v161
  %v699 = vpop.f32.mrb[0].mxu0
  %v700 = vadd.f32 0.0, %v699
  %v701 = vpop.f32.mrb[0].mxu0
  %702 = vmatprep.mubr.f32.mxu0 0.0
  %703 = vmatmul.mubr.f32.gmra.mrb[0].mxu0 %v164
  %v704 = vpop.f32.mrb[0].mxu0
  %v705 = vadd.f32 0.0, %v704
  %v706 = vpop.f32.mrb[0].mxu0
  %707 = vdwg.mxu0
  %708 = vmatprep.subr.mxu0 0.0
  %709 = vmatpush1.msra.mxu0 %v36
  %710 = vmatprep.subr.mxu0 0.0
  %711 = vmatpush1.msra.mxu0 %v37
  %712 = vmatprep.subr.mxu0 0.0
  %713 = vmatpush1.msra.mxu0 %v38
  %714 = vmatprep.subr.mxu0 0.0
  %715 = vmatpush1.msra.mxu0 %v39
  %716 = vmatprep.subr.mxu0 0.0
  %717 = vmatpush1.msra.mxu0 %v40
  %718 = vmatprep.subr.mxu0 0.0
  %719 = vmatpush1.msra.mxu0 %v41
  %720 = vmatprep.subr.mxu0 0.0
  %721 = vmatpush1.msra.mxu0 %v42
  %722 = vmatprep.subr.mxu0 0.0
  %723 = vmatpush1.msra.mxu0 %v43
  %724 = vmatprep.subr.mxu0 0.0
  %725 = vmatpush1.msra.mxu0 %v44
  %726 = vmatprep.subr.mxu0 0.0
  %727 = vmatpush1.msra.mxu0 %v45
  %728 = vmatprep.subr.mxu0 0.0
  %729 = vmatpush1.msra.mxu0 %v46
  %730 = vmatprep.subr.mxu0 0.0
  %731 = vmatpush1.msra.mxu0 %v47
  %732 = vmatprep.subr.mxu0 0.0
  %733 = vmatpush1.msra.mxu0 %v48
  %734 = vmatprep.subr.mxu0 0.0
  %735 = vmatpush1.msra.mxu0 %v49
  %736 = vmatprep.subr.mxu0 0.0
  %737 = vmatpush1.msra.mxu0 %v50
  %738 = vmatprep.subr.mxu0 0.0
  %739 = vmatpush1.msra.mxu0 %v51
  %740 = vmatprep.subr.mxu0 0.0
  %741 = vmatpush1.msra.mxu0 0.0
  %742 = vmatprep.subr.mxu0 0.0
  %743 = vmatpush1.msra.mxu0 0.0
  %744 = vmatprep.subr.mxu0 0.0
  %745 = vmatpush1.msra.mxu0 0.0
  %746 = vmatprep.subr.mxu0 0.0
  %747 = vmatpush1.msra.mxu0 0.0
  %748 = vmatprep.subr.mxu0 0.0
  %749 = vmatpush1.msra.mxu0 0.0
  %750 = vmatprep.subr.mxu0 0.0
  %751 = vmatpush1.msra.mxu0 0.0
  %752 = vmatprep.subr.mxu0 0.0
  %753 = vmatpush1.msra.mxu0 0.0
  %754 = vmatprep.subr.mxu0 0.0
  %755 = vmatpush1.msra.mxu0 0.0
  %756 = vmatprep.subr.mxu0 0.0
  %757 = vmatpush1.msra.mxu0 0.0
  %758 = vmatprep.subr.mxu0 0.0
  %759 = vmatpush1.msra.mxu0 0.0
  %760 = vmatprep.subr.mxu0 0.0
  %761 = vmatpush1.msra.mxu0 0.0
  %762 = vmatprep.subr.mxu0 0.0
  %763 = vmatpush1.msra.mxu0 0.0
  %764 = vmatprep.subr.mxu0 0.0
  %765 = vmatpush1.msra.mxu0 0.0
  %766 = vmatprep.subr.mxu0 0.0
  %767 = vmatpush1.msra.mxu0 0.0
  %768 = vmatprep.subr.mxu0 0.0
  %769 = vmatpush1.msra.mxu0 0.0
  %770 = vmatprep.subr.mxu0 0.0
  %771 = vmatpush1.msra.mxu0 0.0
  %772 = vmatprep.mubr.f32.mxu0 0.0
  %773 = vmatmul.mubr.f32.gmra.mrb[0].mxu0 %v625
  %v774 = vpop.f32.mrb[0].mxu0
  %v775 = vadd.f32 0.0, %v774
  %v776 = vpop.f32.mrb[0].mxu0
  %777 = vmatprep.mubr.f32.mxu0 0.0
  %778 = vmatmul.mubr.f32.gmra.mrb[0].mxu0 %v630
  %v779 = vpop.f32.mrb[0].mxu0
  %v780 = vadd.f32 0.0, %v779
  %v781 = vpop.f32.mrb[0].mxu0
  %782 = vdwg.mxu0
  %783 = vmatprep.subr.mxu0 0.0
  %784 = vmatpush1.msra.mxu0 %v52
  %785 = vmatprep.subr.mxu0 0.0
  %786 = vmatpush1.msra.mxu0 %v53
  %787 = vmatprep.subr.mxu0 0.0
  %788 = vmatpush1.msra.mxu0 %v54
  %789 = vmatprep.subr.mxu0 0.0
  %790 = vmatpush1.msra.mxu0 %v55
  %791 = vmatprep.subr.mxu0 0.0
  %792 = vmatpush1.msra.mxu0 %v56
  %793 = vmatprep.subr.mxu0 0.0
  %794 = vmatpush1.msra.mxu0 %v57
  %795 = vmatprep.subr.mxu0 0.0
  %796 = vmatpush1.msra.mxu0 %v58
  %797 = vmatprep.subr.mxu0 0.0
  %798 = vmatpush1.msra.mxu0 %v59
  %799 = vmatprep.subr.mxu0 0.0
  %800 = vmatpush1.msra.mxu0 %v60
  %801 = vmatprep.subr.mxu0 0.0
  %802 = vmatpush1.msra.mxu0 %v61
  %803 = vmatprep.subr.mxu0 0.0
  %804 = vmatpush1.msra.mxu0 %v62
  %805 = vmatprep.subr.mxu0 0.0
  %806 = vmatpush1.msra.mxu0 %v63
  %807 = vmatprep.subr.mxu0 0.0
  %808 = vmatpush1.msra.mxu0 %v64
  %809 = vmatprep.subr.mxu0 0.0
  %810 = vmatpush1.msra.mxu0 %v65
  %811 = vmatprep.subr.mxu0 0.0
  %812 = vmatpush1.msra.mxu0 %v66
  %813 = vmatprep.subr.mxu0 0.0
  %814 = vmatpush1.msra.mxu0 %v67
  %815 = vmatprep.subr.mxu0 0.0
  %816 = vmatpush1.msra.mxu0 0.0
  %817 = vmatprep.subr.mxu0 0.0
  %818 = vmatpush1.msra.mxu0 0.0
  %819 = vmatprep.subr.mxu0 0.0
  %820 = vmatpush1.msra.mxu0 0.0
  %821 = vmatprep.subr.mxu0 0.0
  %822 = vmatpush1.msra.mxu0 0.0
  %823 = vmatprep.subr.mxu0 0.0
  %824 = vmatpush1.msra.mxu0 0.0
  %825 = vmatprep.subr.mxu0 0.0
  %826 = vmatpush1.msra.mxu0 0.0
  %827 = vmatprep.subr.mxu0 0.0
  %828 = vmatpush1.msra.mxu0 0.0
  %829 = vmatprep.subr.mxu0 0.0
  %830 = vmatpush1.msra.mxu0 0.0
  %831 = vmatprep.subr.mxu0 0.0
  %832 = vmatpush1.msra.mxu0 0.0
  %833 = vmatprep.subr.mxu0 0.0
  %834 = vmatpush1.msra.mxu0 0.0
  %835 = vmatprep.subr.mxu0 0.0
  %836 = vmatpush1.msra.mxu0 0.0
  %837 = vmatprep.subr.mxu0 0.0
  %838 = vmatpush1.msra.mxu0 0.0
  %839 = vmatprep.subr.mxu0 0.0
  %840 = vmatpush1.msra.mxu0 0.0
  %841 = vmatprep.subr.mxu0 0.0
  %842 = vmatpush1.msra.mxu0 0.0
  %843 = vmatprep.subr.mxu0 0.0
  %844 = vmatpush1.msra.mxu0 0.0
  %845 = vmatprep.subr.mxu0 0.0
  %846 = vmatpush1.msra.mxu0 0.0
  %847 = vmatprep.mubr.f32.mxu0 0.0
  %848 = vmatmul.mubr.f32.gmra.mrb[0].mxu0 %v700
  %v849 = vpop.f32.mrb[0].mxu0
  %v850 = vadd.f32 0.0, %v849
  %v851 = vpop.f32.mrb[0].mxu0
  %852 = vmatprep.mubr.f32.mxu0 0.0
  %853 = vmatmul.mubr.f32.gmra.mrb[0].mxu0 %v705
  %v854 = vpop.f32.mrb[0].mxu0
  %v855 = vadd.f32 0.0, %v854
  %v856 = vpop.f32.mrb[0].mxu0
  %857 = vdwg.mxu0
  %v858 = vsub.f32 %v775, %v850
  %v859 = vsub.f32 %v780, %v855
  %860 = vmatprep.subr.mxu0 0.0
  %861 = vmatpush1.msra.mxu0 %v36
  %862 = vmatprep.subr.mxu0 0.0
  %863 = vmatpush1.msra.mxu0 %v37
  %864 = vmatprep.subr.mxu0 0.0
  %865 = vmatpush1.msra.mxu0 %v38
  %866 = vmatprep.subr.mxu0 0.0
  %867 = vmatpush1.msra.mxu0 %v39
  %868 = vmatprep.subr.mxu0 0.0
  %869 = vmatpush1.msra.mxu0 %v40
  %870 = vmatprep.subr.mxu0 0.0
  %871 = vmatpush1.msra.mxu0 %v41
  %872 = vmatprep.subr.mxu0 0.0
  %873 = vmatpush1.msra.mxu0 %v42
  %874 = vmatprep.subr.mxu0 0.0
  %875 = vmatpush1.msra.mxu0 %v43
  %876 = vmatprep.subr.mxu0 0.0
  %877 = vmatpush1.msra.mxu0 %v44
  %878 = vmatprep.subr.mxu0 0.0
  %879 = vmatpush1.msra.mxu0 %v45
  %880 = vmatprep.subr.mxu0 0.0
  %881 = vmatpush1.msra.mxu0 %v46
  %882 = vmatprep.subr.mxu0 0.0
  %883 = vmatpush1.msra.mxu0 %v47
  %884 = vmatprep.subr.mxu0 0.0
  %885 = vmatpush1.msra.mxu0 %v48
  %886 = vmatprep.subr.mxu0 0.0
  %887 = vmatpush1.msra.mxu0 %v49
  %888 = vmatprep.subr.mxu0 0.0
  %889 = vmatpush1.msra.mxu0 %v50
  %890 = vmatprep.subr.mxu0 0.0
  %891 = vmatpush1.msra.mxu0 %v51
  %892 = vmatprep.subr.mxu0 0.0
  %893 = vmatpush1.msra.mxu0 0.0
  %894 = vmatprep.subr.mxu0 0.0
  %895 = vmatpush1.msra.mxu0 0.0
  %896 = vmatprep.subr.mxu0 0.0
  %897 = vmatpush1.msra.mxu0 0.0
  %898 = vmatprep.subr.mxu0 0.0
  %899 = vmatpush1.msra.mxu0 0.0
  %900 = vmatprep.subr.mxu0 0.0
  %901 = vmatpush1.msra.mxu0 0.0
  %902 = vmatprep.subr.mxu0 0.0
  %903 = vmatpush1.msra.mxu0 0.0
  %904 = vmatprep.subr.mxu0 0.0
  %905 = vmatpush1.msra.mxu0 0.0
  %906 = vmatprep.subr.mxu0 0.0
  %907 = vmatpush1.msra.mxu0 0.0
  %908 = vmatprep.subr.mxu0 0.0
  %909 = vmatpush1.msra.mxu0 0.0
  %910 = vmatprep.subr.mxu0 0.0
  %911 = vmatpush1.msra.mxu0 0.0
  %912 = vmatprep.subr.mxu0 0.0
  %913 = vmatpush1.msra.mxu0 0.0
  %914 = vmatprep.subr.mxu0 0.0
  %915 = vmatpush1.msra.mxu0 0.0
  %916 = vmatprep.subr.mxu0 0.0
  %917 = vmatpush1.msra.mxu0 0.0
  %918 = vmatprep.subr.mxu0 0.0
  %919 = vmatpush1.msra.mxu0 0.0
  %920 = vmatprep.subr.mxu0 0.0
  %921 = vmatpush1.msra.mxu0 0.0
  %922 = vmatprep.subr.mxu0 0.0
  %923 = vmatpush1.msra.mxu0 0.0
  %924 = vmatprep.mubr.f32.mxu0 0.0
  %925 = vmatmul.mubr.f32.gmra.mrb[0].mxu0 %v700
  %v926 = vpop.f32.mrb[0].mxu0
  %v927 = vadd.f32 0.0, %v926
  %v928 = vpop.f32.mrb[0].mxu0
  %929 = vmatprep.mubr.f32.mxu0 0.0
  %930 = vmatmul.mubr.f32.gmra.mrb[0].mxu0 %v705
  %v931 = vpop.f32.mrb[0].mxu0
  %v932 = vadd.f32 0.0, %v931
  %v933 = vpop.f32.mrb[0].mxu0
  %934 = vdwg.mxu0
  %935 = vmatprep.subr.mxu0 0.0
  %936 = vmatpush1.msra.mxu0 %v52
  %937 = vmatprep.subr.mxu0 0.0
  %938 = vmatpush1.msra.mxu0 %v53
  %939 = vmatprep.subr.mxu0 0.0
  %940 = vmatpush1.msra.mxu0 %v54
  %941 = vmatprep.subr.mxu0 0.0
  %942 = vmatpush1.msra.mxu0 %v55
  %943 = vmatprep.subr.mxu0 0.0
  %944 = vmatpush1.msra.mxu0 %v56
  %945 = vmatprep.subr.mxu0 0.0
  %946 = vmatpush1.msra.mxu0 %v57
  %947 = vmatprep.subr.mxu0 0.0
  %948 = vmatpush1.msra.mxu0 %v58
  %949 = vmatprep.subr.mxu0 0.0
  %950 = vmatpush1.msra.mxu0 %v59
  %951 = vmatprep.subr.mxu0 0.0
  %952 = vmatpush1.msra.mxu0 %v60
  %953 = vmatprep.subr.mxu0 0.0
  %954 = vmatpush1.msra.mxu0 %v61
  %955 = vmatprep.subr.mxu0 0.0
  %956 = vmatpush1.msra.mxu0 %v62
  %957 = vmatprep.subr.mxu0 0.0
  %958 = vmatpush1.msra.mxu0 %v63
  %959 = vmatprep.subr.mxu0 0.0
  %960 = vmatpush1.msra.mxu0 %v64
  %961 = vmatprep.subr.mxu0 0.0
  %962 = vmatpush1.msra.mxu0 %v65
  %963 = vmatprep.subr.mxu0 0.0
  %964 = vmatpush1.msra.mxu0 %v66
  %965 = vmatprep.subr.mxu0 0.0
  %966 = vmatpush1.msra.mxu0 %v67
  %967 = vmatprep.subr.mxu0 0.0
  %968 = vmatpush1.msra.mxu0 0.0
  %969 = vmatprep.subr.mxu0 0.0
  %970 = vmatpush1.msra.mxu0 0.0
  %971 = vmatprep.subr.mxu0 0.0
  %972 = vmatpush1.msra.mxu0 0.0
  %973 = vmatprep.subr.mxu0 0.0
  %974 = vmatpush1.msra.mxu0 0.0
  %975 = vmatprep.subr.mxu0 0.0
  %976 = vmatpush1.msra.mxu0 0.0
  %977 = vmatprep.subr.mxu0 0.0
  %978 = vmatpush1.msra.mxu0 0.0
  %979 = vmatprep.subr.mxu0 0.0
  %980 = vmatpush1.msra.mxu0 0.0
  %981 = vmatprep.subr.mxu0 0.0
  %982 = vmatpush1.msra.mxu0 0.0
  %983 = vmatprep.subr.mxu0 0.0
  %984 = vmatpush1.msra.mxu0 0.0
  %985 = vmatprep.subr.mxu0 0.0
  %986 = vmatpush1.msra.mxu0 0.0
  %987 = vmatprep.subr.mxu0 0.0
  %988 = vmatpush1.msra.mxu0 0.0
  %989 = vmatprep.subr.mxu0 0.0
  %990 = vmatpush1.msra.mxu0 0.0
  %991 = vmatprep.subr.mxu0 0.0
  %992 = vmatpush1.msra.mxu0 0.0
  %993 = vmatprep.subr.mxu0 0.0
  %994 = vmatpush1.msra.mxu0 0.0
  %995 = vmatprep.subr.mxu0 0.0
  %996 = vmatpush1.msra.mxu0 0.0
  %997 = vmatprep.subr.mxu0 0.0
  %998 = vmatpush1.msra.mxu0 0.0
  %999 = vmatprep.mubr.f32.mxu0 0.0
  %1000 = vmatmul.mubr.f32.gmra.mrb[0].mxu0 %v625
  %v1001 = vpop.f32.mrb[0].mxu0
  %v1002 = vadd.f32 %v927, %v1001
  %v1003 = vpop.f32.mrb[0].mxu0
  %1004 = vmatprep.mubr.f32.mxu0 0.0
  %1005 = vmatmul.mubr.f32.gmra.mrb[0].mxu0 %v630
  %v1006 = vpop.f32.mrb[0].mxu0
  %v1007 = vadd.f32 %v932, %v1006
  %v1008 = vpop.f32.mrb[0].mxu0
  %1009 = vdwg.mxu0
  %v1010 = vld [vmem:[%s2] sm:$0xff]
  %v1011 = vld [vmem:[%s2 + $0x8] sm:$0xff]
  %1012 = vmatprep.subr.mxu0 0.0
  %1013 = vmatpush1.msra.mxu0 %v1010
  %1014 = vmatprep.subr.mxu0 0.0
  %1015 = vmatpush1.msra.mxu0 %v1011
  %1016 = vmatprep.subr.mxu0 0.0
  %1017 = vmatpush1.msra.mxu0 0.0
  %1018 = vmatprep.subr.mxu0 0.0
  %1019 = vmatpush1.msra.mxu0 0.0
  %1020 = vmatprep.subr.mxu0 0.0
  %1021 = vmatpush1.msra.mxu0 0.0
  %1022 = vmatprep.subr.mxu0 0.0
  %1023 = vmatpush1.msra.mxu0 0.0
  %1024 = vmatprep.subr.mxu0 0.0
  %1025 = vmatpush1.msra.mxu0 0.0
  %1026 = vmatprep.subr.mxu0 0.0
  %1027 = vmatpush1.msra.mxu0 0.0
  %1028 = vmatprep.subr.mxu0 0.0
  %1029 = vmatpush1.msra.mxu0 0.0
  %1030 = vmatprep.subr.mxu0 0.0
  %1031 = vmatpush1.msra.mxu0 0.0
  %1032 = vmatprep.subr.mxu0 0.0
  %1033 = vmatpush1.msra.mxu0 0.0
  %1034 = vmatprep.subr.mxu0 0.0
  %1035 = vmatpush1.msra.mxu0 0.0
  %1036 = vmatprep.subr.mxu0 0.0
  %1037 = vmatpush1.msra.mxu0 0.0
  %1038 = vmatprep.subr.mxu0 0.0
  %1039 = vmatpush1.msra.mxu0 0.0
  %1040 = vmatprep.subr.mxu0 0.0
  %1041 = vmatpush1.msra.mxu0 0.0
  %1042 = vmatprep.subr.mxu0 0.0
  %1043 = vmatpush1.msra.mxu0 0.0
  %1044 = vmatprep.subr.mxu0 0.0
  %1045 = vmatpush1.msra.mxu0 0.0
  %1046 = vmatprep.subr.mxu0 0.0
  %1047 = vmatpush1.msra.mxu0 0.0
  %1048 = vmatprep.subr.mxu0 0.0
  %1049 = vmatpush1.msra.mxu0 0.0
  %1050 = vmatprep.subr.mxu0 0.0
  %1051 = vmatpush1.msra.mxu0 0.0
  %1052 = vmatprep.subr.mxu0 0.0
  %1053 = vmatpush1.msra.mxu0 0.0
  %1054 = vmatprep.subr.mxu0 0.0
  %1055 = vmatpush1.msra.mxu0 0.0
  %1056 = vmatprep.subr.mxu0 0.0
  %1057 = vmatpush1.msra.mxu0 0.0
  %1058 = vmatprep.subr.mxu0 0.0
  %1059 = vmatpush1.msra.mxu0 0.0
  %1060 = vmatprep.subr.mxu0 0.0
  %1061 = vmatpush1.msra.mxu0 0.0
  %1062 = vmatprep.subr.mxu0 0.0
  %1063 = vmatpush1.msra.mxu0 0.0
  %1064 = vmatprep.subr.mxu0 0.0
  %1065 = vmatpush1.msra.mxu0 0.0
  %1066 = vmatprep.subr.mxu0 0.0
  %1067 = vmatpush1.msra.mxu0 0.0
  %1068 = vmatprep.subr.mxu0 0.0
  %1069 = vmatpush1.msra.mxu0 0.0
  %1070 = vmatprep.subr.mxu0 0.0
  %1071 = vmatpush1.msra.mxu0 0.0
  %1072 = vmatprep.subr.mxu0 0.0
  %1073 = vmatpush1.msra.mxu0 0.0
  %1074 = vmatprep.subr.mxu0 0.0
  %1075 = vmatpush1.msra.mxu0 0.0
  %1076 = vmatprep.mubr.f32.mxu0 0.0
  %1077 = vmatmul.mubr.f32.gmra.mrb[0].mxu0 %v80
  %v1078 = vpop.f32.mrb[0].mxu0
  %v1079 = vadd.f32 0.0, %v1078
  %v1080 = vpop.f32.mrb[0].mxu0
  %1081 = vmatprep.mubr.f32.mxu0 0.0
  %1082 = vmatmul.mubr.f32.gmra.mrb[0].mxu0 %v83
  %v1083 = vpop.f32.mrb[0].mxu0
  %v1084 = vadd.f32 0.0, %v1083
  %v1085 = vpop.f32.mrb[0].mxu0
  %1086 = vdwg.mxu0
  %1087 = vmatprep.subr.mxu0 0.0
  %1088 = vmatpush1.msra.mxu0 %v1010
  %1089 = vmatprep.subr.mxu0 0.0
  %1090 = vmatpush1.msra.mxu0 %v1011
  %1091 = vmatprep.subr.mxu0 0.0
  %1092 = vmatpush1.msra.mxu0 0.0
  %1093 = vmatprep.subr.mxu0 0.0
  %1094 = vmatpush1.msra.mxu0 0.0
  %1095 = vmatprep.subr.mxu0 0.0
  %1096 = vmatpush1.msra.mxu0 0.0
  %1097 = vmatprep.subr.mxu0 0.0
  %1098 = vmatpush1.msra.mxu0 0.0
  %1099 = vmatprep.subr.mxu0 0.0
  %1100 = vmatpush1.msra.mxu0 0.0
  %1101 = vmatprep.subr.mxu0 0.0
  %1102 = vmatpush1.msra.mxu0 0.0
  %1103 = vmatprep.subr.mxu0 0.0
  %1104 = vmatpush1.msra.mxu0 0.0
  %1105 = vmatprep.subr.mxu0 0.0
  %1106 = vmatpush1.msra.mxu0 0.0
  %1107 = vmatprep.subr.mxu0 0.0
  %1108 = vmatpush1.msra.mxu0 0.0
  %1109 = vmatprep.subr.mxu0 0.0
  %1110 = vmatpush1.msra.mxu0 0.0
  %1111 = vmatprep.subr.mxu0 0.0
  %1112 = vmatpush1.msra.mxu0 0.0
  %1113 = vmatprep.subr.mxu0 0.0
  %1114 = vmatpush1.msra.mxu0 0.0
  %1115 = vmatprep.subr.mxu0 0.0
  %1116 = vmatpush1.msra.mxu0 0.0
  %1117 = vmatprep.subr.mxu0 0.0
  %1118 = vmatpush1.msra.mxu0 0.0
  %1119 = vmatprep.subr.mxu0 0.0
  %1120 = vmatpush1.msra.mxu0 0.0
  %1121 = vmatprep.subr.mxu0 0.0
  %1122 = vmatpush1.msra.mxu0 0.0
  %1123 = vmatprep.subr.mxu0 0.0
  %1124 = vmatpush1.msra.mxu0 0.0
  %1125 = vmatprep.subr.mxu0 0.0
  %1126 = vmatpush1.msra.mxu0 0.0
  %1127 = vmatprep.subr.mxu0 0.0
  %1128 = vmatpush1.msra.mxu0 0.0
  %1129 = vmatprep.subr.mxu0 0.0
  %1130 = vmatpush1.msra.mxu0 0.0
  %1131 = vmatprep.subr.mxu0 0.0
  %1132 = vmatpush1.msra.mxu0 0.0
  %1133 = vmatprep.subr.mxu0 0.0
  %1134 = vmatpush1.msra.mxu0 0.0
  %1135 = vmatprep.subr.mxu0 0.0
  %1136 = vmatpush1.msra.mxu0 0.0
  %1137 = vmatprep.subr.mxu0 0.0
  %1138 = vmatpush1.msra.mxu0 0.0
  %1139 = vmatprep.subr.mxu0 0.0
  %1140 = vmatpush1.msra.mxu0 0.0
  %1141 = vmatprep.subr.mxu0 0.0
  %1142 = vmatpush1.msra.mxu0 0.0
  %1143 = vmatprep.subr.mxu0 0.0
  %1144 = vmatpush1.msra.mxu0 0.0
  %1145 = vmatprep.subr.mxu0 0.0
  %1146 = vmatpush1.msra.mxu0 0.0
  %1147 = vmatprep.subr.mxu0 0.0
  %1148 = vmatpush1.msra.mxu0 0.0
  %1149 = vmatprep.subr.mxu0 0.0
  %1150 = vmatpush1.msra.mxu0 0.0
  %1151 = vmatprep.mubr.f32.mxu0 0.0
  %1152 = vmatmul.mubr.f32.gmra.mrb[0].mxu0 %v161
  %v1153 = vpop.f32.mrb[0].mxu0
  %v1154 = vadd.f32 0.0, %v1153
  %v1155 = vpop.f32.mrb[0].mxu0
  %1156 = vmatprep.mubr.f32.mxu0 0.0
  %1157 = vmatmul.mubr.f32.gmra.mrb[0].mxu0 %v164
  %v1158 = vpop.f32.mrb[0].mxu0
  %v1159 = vadd.f32 0.0, %v1158
  %v1160 = vpop.f32.mrb[0].mxu0
  %1161 = vdwg.mxu0
  %1162 = vmatprep.subr.mxu0 0.0
  %1163 = vmatpush1.msra.mxu0 %v36
  %1164 = vmatprep.subr.mxu0 0.0
  %1165 = vmatpush1.msra.mxu0 %v37
  %1166 = vmatprep.subr.mxu0 0.0
  %1167 = vmatpush1.msra.mxu0 %v38
  %1168 = vmatprep.subr.mxu0 0.0
  %1169 = vmatpush1.msra.mxu0 %v39
  %1170 = vmatprep.subr.mxu0 0.0
  %1171 = vmatpush1.msra.mxu0 %v40
  %1172 = vmatprep.subr.mxu0 0.0
  %1173 = vmatpush1.msra.mxu0 %v41
  %1174 = vmatprep.subr.mxu0 0.0
  %1175 = vmatpush1.msra.mxu0 %v42
  %1176 = vmatprep.subr.mxu0 0.0
  %1177 = vmatpush1.msra.mxu0 %v43
  %1178 = vmatprep.subr.mxu0 0.0
  %1179 = vmatpush1.msra.mxu0 %v44
  %1180 = vmatprep.subr.mxu0 0.0
  %1181 = vmatpush1.msra.mxu0 %v45
  %1182 = vmatprep.subr.mxu0 0.0
  %1183 = vmatpush1.msra.mxu0 %v46
  %1184 = vmatprep.subr.mxu0 0.0
  %1185 = vmatpush1.msra.mxu0 %v47
  %1186 = vmatprep.subr.mxu0 0.0
  %1187 = vmatpush1.msra.mxu0 %v48
  %1188 = vmatprep.subr.mxu0 0.0
  %1189 = vmatpush1.msra.mxu0 %v49
  %1190 = vmatprep.subr.mxu0 0.0
  %1191 = vmatpush1.msra.mxu0 %v50
  %1192 = vmatprep.subr.mxu0 0.0
  %1193 = vmatpush1.msra.mxu0 %v51
  %1194 = vmatprep.subr.mxu0 0.0
  %1195 = vmatpush1.msra.mxu0 0.0
  %1196 = vmatprep.subr.mxu0 0.0
  %1197 = vmatpush1.msra.mxu0 0.0
  %1198 = vmatprep.subr.mxu0 0.0
  %1199 = vmatpush1.msra.mxu0 0.0
  %1200 = vmatprep.subr.mxu0 0.0
  %1201 = vmatpush1.msra.mxu0 0.0
  %1202 = vmatprep.subr.mxu0 0.0
  %1203 = vmatpush1.msra.mxu0 0.0
  %1204 = vmatprep.subr.mxu0 0.0
  %1205 = vmatpush1.msra.mxu0 0.0
  %1206 = vmatprep.subr.mxu0 0.0
  %1207 = vmatpush1.msra.mxu0 0.0
  %1208 = vmatprep.subr.mxu0 0.0
  %1209 = vmatpush1.msra.mxu0 0.0
  %1210 = vmatprep.subr.mxu0 0.0
  %1211 = vmatpush1.msra.mxu0 0.0
  %1212 = vmatprep.subr.mxu0 0.0
  %1213 = vmatpush1.msra.mxu0 0.0
  %1214 = vmatprep.subr.mxu0 0.0
  %1215 = vmatpush1.msra.mxu0 0.0
  %1216 = vmatprep.subr.mxu0 0.0
  %1217 = vmatpush1.msra.mxu0 0.0
  %1218 = vmatprep.subr.mxu0 0.0
  %1219 = vmatpush1.msra.mxu0 0.0
  %1220 = vmatprep.subr.mxu0 0.0
  %1221 = vmatpush1.msra.mxu0 0.0
  %1222 = vmatprep.subr.mxu0 0.0
  %1223 = vmatpush1.msra.mxu0 0.0
  %1224 = vmatprep.subr.mxu0 0.0
  %1225 = vmatpush1.msra.mxu0 0.0
  %1226 = vmatprep.mubr.f32.mxu0 0.0
  %1227 = vmatmul.mubr.f32.gmra.mrb[0].mxu0 %v1079
  %v1228 = vpop.f32.mrb[0].mxu0
  %v1229 = vadd.f32 0.0, %v1228
  %v1230 = vpop.f32.mrb[0].mxu0
  %1231 = vmatprep.mubr.f32.mxu0 0.0
  %1232 = vmatmul.mubr.f32.gmra.mrb[0].mxu0 %v1084
  %v1233 = vpop.f32.mrb[0].mxu0
  %v1234 = vadd.f32 0.0, %v1233
  %v1235 = vpop.f32.mrb[0].mxu0
  %1236 = vdwg.mxu0
  %1237 = vmatprep.subr.mxu0 0.0
  %1238 = vmatpush1.msra.mxu0 %v52
  %1239 = vmatprep.subr.mxu0 0.0
  %1240 = vmatpush1.msra.mxu0 %v53
  %1241 = vmatprep.subr.mxu0 0.0
  %1242 = vmatpush1.msra.mxu0 %v54
  %1243 = vmatprep.subr.mxu0 0.0
  %1244 = vmatpush1.msra.mxu0 %v55
  %1245 = vmatprep.subr.mxu0 0.0
  %1246 = vmatpush1.msra.mxu0 %v56
  %1247 = vmatprep.subr.mxu0 0.0
  %1248 = vmatpush1.msra.mxu0 %v57
  %1249 = vmatprep.subr.mxu0 0.0
  %1250 = vmatpush1.msra.mxu0 %v58
  %1251 = vmatprep.subr.mxu0 0.0
  %1252 = vmatpush1.msra.mxu0 %v59
  %1253 = vmatprep.subr.mxu0 0.0
  %1254 = vmatpush1.msra.mxu0 %v60
  %1255 = vmatprep.subr.mxu0 0.0
  %1256 = vmatpush1.msra.mxu0 %v61
  %1257 = vmatprep.subr.mxu0 0.0
  %1258 = vmatpush1.msra.mxu0 %v62
  %1259 = vmatprep.subr.mxu0 0.0
  %1260 = vmatpush1.msra.mxu0 %v63
  %1261 = vmatprep.subr.mxu0 0.0
  %1262 = vmatpush1.msra.mxu0 %v64
  %1263 = vmatprep.subr.mxu0 0.0
  %1264 = vmatpush1.msra.mxu0 %v65
  %1265 = vmatprep.subr.mxu0 0.0
  %1266 = vmatpush1.msra.mxu0 %v66
  %1267 = vmatprep.subr.mxu0 0.0
  %1268 = vmatpush1.msra.mxu0 %v67
  %1269 = vmatprep.subr.mxu0 0.0
  %1270 = vmatpush1.msra.mxu0 0.0
  %1271 = vmatprep.subr.mxu0 0.0
  %1272 = vmatpush1.msra.mxu0 0.0
  %1273 = vmatprep.subr.mxu0 0.0
  %1274 = vmatpush1.msra.mxu0 0.0
  %1275 = vmatprep.subr.mxu0 0.0
  %1276 = vmatpush1.msra.mxu0 0.0
  %1277 = vmatprep.subr.mxu0 0.0
  %1278 = vmatpush1.msra.mxu0 0.0
  %1279 = vmatprep.subr.mxu0 0.0
  %1280 = vmatpush1.msra.mxu0 0.0
  %1281 = vmatprep.subr.mxu0 0.0
  %1282 = vmatpush1.msra.mxu0 0.0
  %1283 = vmatprep.subr.mxu0 0.0
  %1284 = vmatpush1.msra.mxu0 0.0
  %1285 = vmatprep.subr.mxu0 0.0
  %1286 = vmatpush1.msra.mxu0 0.0
  %1287 = vmatprep.subr.mxu0 0.0
  %1288 = vmatpush1.msra.mxu0 0.0
  %1289 = vmatprep.subr.mxu0 0.0
  %1290 = vmatpush1.msra.mxu0 0.0
  %1291 = vmatprep.subr.mxu0 0.0
  %1292 = vmatpush1.msra.mxu0 0.0
  %1293 = vmatprep.subr.mxu0 0.0
  %1294 = vmatpush1.msra.mxu0 0.0
  %1295 = vmatprep.subr.mxu0 0.0
  %1296 = vmatpush1.msra.mxu0 0.0
  %1297 = vmatprep.subr.mxu0 0.0
  %1298 = vmatpush1.msra.mxu0 0.0
  %1299 = vmatprep.subr.mxu0 0.0
  %1300 = vmatpush1.msra.mxu0 0.0
  %1301 = vmatprep.mubr.f32.mxu0 0.0
  %1302 = vmatmul.mubr.f32.gmra.mrb[0].mxu0 %v1154
  %v1303 = vpop.f32.mrb[0].mxu0
  %v1304 = vadd.f32 0.0, %v1303
  %v1305 = vpop.f32.mrb[0].mxu0
  %1306 = vmatprep.mubr.f32.mxu0 0.0
  %1307 = vmatmul.mubr.f32.gmra.mrb[0].mxu0 %v1159
  %v1308 = vpop.f32.mrb[0].mxu0
  %v1309 = vadd.f32 0.0, %v1308
  %v1310 = vpop.f32.mrb[0].mxu0
  %1311 = vdwg.mxu0
  %v1312 = vsub.f32 %v1229, %v1304
  %v1313 = vsub.f32 %v1234, %v1309
  %1314 = vmatprep.subr.mxu0 0.0
  %1315 = vmatpush1.msra.mxu0 %v36
  %1316 = vmatprep.subr.mxu0 0.0
  %1317 = vmatpush1.msra.mxu0 %v37
  %1318 = vmatprep.subr.mxu0 0.0
  %1319 = vmatpush1.msra.mxu0 %v38
  %1320 = vmatprep.subr.mxu0 0.0
  %1321 = vmatpush1.msra.mxu0 %v39
  %1322 = vmatprep.subr.mxu0 0.0
  %1323 = vmatpush1.msra.mxu0 %v40
  %1324 = vmatprep.subr.mxu0 0.0
  %1325 = vmatpush1.msra.mxu0 %v41
  %1326 = vmatprep.subr.mxu0 0.0
  %1327 = vmatpush1.msra.mxu0 %v42
  %1328 = vmatprep.subr.mxu0 0.0
  %1329 = vmatpush1.msra.mxu0 %v43
  %1330 = vmatprep.subr.mxu0 0.0
  %1331 = vmatpush1.msra.mxu0 %v44
  %1332 = vmatprep.subr.mxu0 0.0
  %1333 = vmatpush1.msra.mxu0 %v45
  %1334 = vmatprep.subr.mxu0 0.0
  %1335 = vmatpush1.msra.mxu0 %v46
  %1336 = vmatprep.subr.mxu0 0.0
  %1337 = vmatpush1.msra.mxu0 %v47
  %1338 = vmatprep.subr.mxu0 0.0
  %1339 = vmatpush1.msra.mxu0 %v48
  %1340 = vmatprep.subr.mxu0 0.0
  %1341 = vmatpush1.msra.mxu0 %v49
  %1342 = vmatprep.subr.mxu0 0.0
  %1343 = vmatpush1.msra.mxu0 %v50
  %1344 = vmatprep.subr.mxu0 0.0
  %1345 = vmatpush1.msra.mxu0 %v51
  %1346 = vmatprep.subr.mxu0 0.0
  %1347 = vmatpush1.msra.mxu0 0.0
  %1348 = vmatprep.subr.mxu0 0.0
  %1349 = vmatpush1.msra.mxu0 0.0
  %1350 = vmatprep.subr.mxu0 0.0
  %1351 = vmatpush1.msra.mxu0 0.0
  %1352 = vmatprep.subr.mxu0 0.0
  %1353 = vmatpush1.msra.mxu0 0.0
  %1354 = vmatprep.subr.mxu0 0.0
  %1355 = vmatpush1.msra.mxu0 0.0
  %1356 = vmatprep.subr.mxu0 0.0
  %1357 = vmatpush1.msra.mxu0 0.0
  %1358 = vmatprep.subr.mxu0 0.0
  %1359 = vmatpush1.msra.mxu0 0.0
  %1360 = vmatprep.subr.mxu0 0.0
  %1361 = vmatpush1.msra.mxu0 0.0
  %1362 = vmatprep.subr.mxu0 0.0
  %1363 = vmatpush1.msra.mxu0 0.0
  %1364 = vmatprep.subr.mxu0 0.0
  %1365 = vmatpush1.msra.mxu0 0.0
  %1366 = vmatprep.subr.mxu0 0.0
  %1367 = vmatpush1.msra.mxu0 0.0
  %1368 = vmatprep.subr.mxu0 0.0
  %1369 = vmatpush1.msra.mxu0 0.0
  %1370 = vmatprep.subr.mxu0 0.0
  %1371 = vmatpush1.msra.mxu0 0.0
  %1372 = vmatprep.subr.mxu0 0.0
  %1373 = vmatpush1.msra.mxu0 0.0
  %1374 = vmatprep.subr.mxu0 0.0
  %1375 = vmatpush1.msra.mxu0 0.0
  %1376 = vmatprep.subr.mxu0 0.0
  %1377 = vmatpush1.msra.mxu0 0.0
  %1378 = vmatprep.mubr.f32.mxu0 0.0
  %1379 = vmatmul.mubr.f32.gmra.mrb[0].mxu0 %v1154
  %v1380 = vpop.f32.mrb[0].mxu0
  %v1381 = vadd.f32 0.0, %v1380
  %v1382 = vpop.f32.mrb[0].mxu0
  %1383 = vmatprep.mubr.f32.mxu0 0.0
  %1384 = vmatmul.mubr.f32.gmra.mrb[0].mxu0 %v1159
  %v1385 = vpop.f32.mrb[0].mxu0
  %v1386 = vadd.f32 0.0, %v1385
  %v1387 = vpop.f32.mrb[0].mxu0
  %1388 = vdwg.mxu0
  %1389 = vmatprep.subr.mxu0 0.0
  %1390 = vmatpush1.msra.mxu0 %v52
  %1391 = vmatprep.subr.mxu0 0.0
  %1392 = vmatpush1.msra.mxu0 %v53
  %1393 = vmatprep.subr.mxu0 0.0
  %1394 = vmatpush1.msra.mxu0 %v54
  %1395 = vmatprep.subr.mxu0 0.0
  %1396 = vmatpush1.msra.mxu0 %v55
  %1397 = vmatprep.subr.mxu0 0.0
  %1398 = vmatpush1.msra.mxu0 %v56
  %1399 = vmatprep.subr.mxu0 0.0
  %1400 = vmatpush1.msra.mxu0 %v57
  %1401 = vmatprep.subr.mxu0 0.0
  %1402 = vmatpush1.msra.mxu0 %v58
  %1403 = vmatprep.subr.mxu0 0.0
  %1404 = vmatpush1.msra.mxu0 %v59
  %1405 = vmatprep.subr.mxu0 0.0
  %1406 = vmatpush1.msra.mxu0 %v60
  %1407 = vmatprep.subr.mxu0 0.0
  %1408 = vmatpush1.msra.mxu0 %v61
  %1409 = vmatprep.subr.mxu0 0.0
  %1410 = vmatpush1.msra.mxu0 %v62
  %1411 = vmatprep.subr.mxu0 0.0
  %1412 = vmatpush1.msra.mxu0 %v63
  %1413 = vmatprep.subr.mxu0 0.0
  %1414 = vmatpush1.msra.mxu0 %v64
  %1415 = vmatprep.subr.mxu0 0.0
  %1416 = vmatpush1.msra.mxu0 %v65
  %1417 = vmatprep.subr.mxu0 0.0
  %1418 = vmatpush1.msra.mxu0 %v66
  %1419 = vmatprep.subr.mxu0 0.0
  %1420 = vmatpush1.msra.mxu0 %v67
  %1421 = vmatprep.subr.mxu0 0.0
  %1422 = vmatpush1.msra.mxu0 0.0
  %1423 = vmatprep.subr.mxu0 0.0
  %1424 = vmatpush1.msra.mxu0 0.0
  %1425 = vmatprep.subr.mxu0 0.0
  %1426 = vmatpush1.msra.mxu0 0.0
  %1427 = vmatprep.subr.mxu0 0.0
  %1428 = vmatpush1.msra.mxu0 0.0
  %1429 = vmatprep.subr.mxu0 0.0
  %1430 = vmatpush1.msra.mxu0 0.0
  %1431 = vmatprep.subr.mxu0 0.0
  %1432 = vmatpush1.msra.mxu0 0.0
  %1433 = vmatprep.subr.mxu0 0.0
  %1434 = vmatpush1.msra.mxu0 0.0
  %1435 = vmatprep.subr.mxu0 0.0
  %1436 = vmatpush1.msra.mxu0 0.0
  %1437 = vmatprep.subr.mxu0 0.0
  %1438 = vmatpush1.msra.mxu0 0.0
  %1439 = vmatprep.subr.mxu0 0.0
  %1440 = vmatpush1.msra.mxu0 0.0
  %1441 = vmatprep.subr.mxu0 0.0
  %1442 = vmatpush1.msra.mxu0 0.0
  %1443 = vmatprep.subr.mxu0 0.0
  %1444 = vmatpush1.msra.mxu0 0.0
  %1445 = vmatprep.subr.mxu0 0.0
  %1446 = vmatpush1.msra.mxu0 0.0
  %1447 = vmatprep.subr.mxu0 0.0
  %1448 = vmatpush1.msra.mxu0 0.0
  %1449 = vmatprep.subr.mxu0 0.0
  %1450 = vmatpush1.msra.mxu0 0.0
  %1451 = vmatprep.subr.mxu0 0.0
  %1452 = vmatpush1.msra.mxu0 0.0
  %1453 = vmatprep.mubr.f32.mxu0 0.0
  %1454 = vmatmul.mubr.f32.gmra.mrb[0].mxu0 %v1079
  %v1455 = vpop.f32.mrb[0].mxu0
  %v1456 = vadd.f32 %v1381, %v1455
  %v1457 = vpop.f32.mrb[0].mxu0
  %1458 = vmatprep.mubr.f32.mxu0 0.0
  %1459 = vmatmul.mubr.f32.gmra.mrb[0].mxu0 %v1084
  %v1460 = vpop.f32.mrb[0].mxu0
  %v1461 = vadd.f32 %v1386, %v1460
  %v1462 = vpop.f32.mrb[0].mxu0
  %1463 = vdwg.mxu0
  %v1464 = vmul.f32 %v404, %v404
  %v1465 = vmul.f32 %v405, %v405
  %v1466 = vmul.f32 %v548, %v548
  %v1467 = vmul.f32 %v553, %v553
  %v1468 = vadd.f32 %v1464, %v1466
  %v1469 = vadd.f32 %v1465, %v1467
  %v1470 = vadd.f32 %v1468, 0.1
  %v1471 = vadd.f32 %v1469, 0.1
  %v1472 = vrcp.pop %v1470
  %v1473 = vrcp.pop %v1471
  %v1474 = vmul.f32 %v1470, %v1472
  %v1475 = vmul.f32 %v1471, %v1473
  %v1476 = vsub.f32 2.0, %v1474
  %v1477 = vsub.f32 2.0, %v1475
  %v1478 = vmul.f32 %v1472, %v1476
  %v1479 = vmul.f32 %v1473, %v1477
  %v1480 = vmul.f32 %v1478, 0.00390625
  %v1481 = vmul.f32 %v1479, 0.00390625
  %v1482 = vmul.f32 %v404, %v858
  %v1483 = vmul.f32 %v405, %v859
  %v1484 = vmul.f32 %v548, %v1002
  %v1485 = vmul.f32 %v553, %v1007
  %v1486 = vadd.f32 %v1482, %v1484
  %v1487 = vadd.f32 %v1483, %v1485
  %v1488 = vmul.f32 %v1312, 0.1
  %v1489 = vmul.f32 %v1313, 0.1
  %v1490 = vadd.f32 %v1486, %v1488
  %v1491 = vadd.f32 %v1487, %v1489
  %v1492 = vmul.f32 %v1490, %v1480
  %v1493 = vmul.f32 %v1491, %v1481
  %v1494 = vmul.f32 %v404, %v1002
  %v1495 = vmul.f32 %v405, %v1007
  %v1496 = vmul.f32 %v548, %v858
  %v1497 = vmul.f32 %v553, %v859
  %v1498 = vsub.f32 %v1494, %v1496
  %v1499 = vsub.f32 %v1495, %v1497
  %v1500 = vmul.f32 %v1456, 0.1
  %v1501 = vmul.f32 %v1461, 0.1
  %v1502 = vadd.f32 %v1498, %v1500
  %v1503 = vadd.f32 %v1499, %v1501
  %v1504 = vmul.f32 %v1502, %v1480
  %v1505 = vmul.f32 %v1503, %v1481
  %1506 = vmatprep.subr.mxu0 0.0
  %1507 = vmatpush1.msra.mxu0 %v1504
  %1508 = vmatprep.subr.mxu0 0.0
  %1509 = vmatpush1.msra.mxu0 %v1505
  %1510 = vmatprep.subr.mxu0 0.0
  %1511 = vmatpush1.msra.mxu0 0.0
  %1512 = vmatprep.subr.mxu0 0.0
  %1513 = vmatpush1.msra.mxu0 0.0
  %1514 = vmatprep.subr.mxu0 0.0
  %1515 = vmatpush1.msra.mxu0 0.0
  %1516 = vmatprep.subr.mxu0 0.0
  %1517 = vmatpush1.msra.mxu0 0.0
  %1518 = vmatprep.subr.mxu0 0.0
  %1519 = vmatpush1.msra.mxu0 0.0
  %1520 = vmatprep.subr.mxu0 0.0
  %1521 = vmatpush1.msra.mxu0 0.0
  %1522 = vmatprep.subr.mxu0 0.0
  %1523 = vmatpush1.msra.mxu0 0.0
  %1524 = vmatprep.subr.mxu0 0.0
  %1525 = vmatpush1.msra.mxu0 0.0
  %1526 = vmatprep.subr.mxu0 0.0
  %1527 = vmatpush1.msra.mxu0 0.0
  %1528 = vmatprep.subr.mxu0 0.0
  %1529 = vmatpush1.msra.mxu0 0.0
  %1530 = vmatprep.subr.mxu0 0.0
  %1531 = vmatpush1.msra.mxu0 0.0
  %1532 = vmatprep.subr.mxu0 0.0
  %1533 = vmatpush1.msra.mxu0 0.0
  %1534 = vmatprep.subr.mxu0 0.0
  %1535 = vmatpush1.msra.mxu0 0.0
  %1536 = vmatprep.subr.mxu0 0.0
  %1537 = vmatpush1.msra.mxu0 0.0
  %1538 = vmatprep.subr.mxu0 0.0
  %1539 = vmatpush1.msra.mxu0 0.0
  %1540 = vmatprep.subr.mxu0 0.0
  %1541 = vmatpush1.msra.mxu0 0.0
  %1542 = vmatprep.subr.mxu0 0.0
  %1543 = vmatpush1.msra.mxu0 0.0
  %1544 = vmatprep.subr.mxu0 0.0
  %1545 = vmatpush1.msra.mxu0 0.0
  %1546 = vmatprep.subr.mxu0 0.0
  %1547 = vmatpush1.msra.mxu0 0.0
  %1548 = vmatprep.subr.mxu0 0.0
  %1549 = vmatpush1.msra.mxu0 0.0
  %1550 = vmatprep.subr.mxu0 0.0
  %1551 = vmatpush1.msra.mxu0 0.0
  %1552 = vmatprep.subr.mxu0 0.0
  %1553 = vmatpush1.msra.mxu0 0.0
  %1554 = vmatprep.subr.mxu0 0.0
  %1555 = vmatpush1.msra.mxu0 0.0
  %1556 = vmatprep.subr.mxu0 0.0
  %1557 = vmatpush1.msra.mxu0 0.0
  %1558 = vmatprep.subr.mxu0 0.0
  %1559 = vmatpush1.msra.mxu0 0.0
  %1560 = vmatprep.subr.mxu0 0.0
  %1561 = vmatpush1.msra.mxu0 0.0
  %1562 = vmatprep.subr.mxu0 0.0
  %1563 = vmatpush1.msra.mxu0 0.0
  %1564 = vmatprep.subr.mxu0 0.0
  %1565 = vmatpush1.msra.mxu0 0.0
  %1566 = vmatprep.subr.mxu0 0.0
  %1567 = vmatpush1.msra.mxu0 0.0
  %1568 = vmatprep.subr.mxu0 0.0
  %1569 = vmatpush1.msra.mxu0 0.0
  %1570 = vmatprep.mubr.f32.mxu0 0.0
  %1571 = vmatmul.mubr.f32.gmra.mrb[0].mxu0 %v161
  %v1572 = vpop.f32.mrb[0].mxu0
  %v1573 = vadd.f32 0.0, %v1572
  %v1574 = vpop.f32.mrb[0].mxu0
  %1575 = vmatprep.mubr.f32.mxu0 0.0
  %1576 = vmatmul.mubr.f32.gmra.mrb[0].mxu0 %v164
  %v1577 = vpop.f32.mrb[0].mxu0
  %v1578 = vadd.f32 0.0, %v1577
  %v1579 = vpop.f32.mrb[0].mxu0
  %1580 = vdwg.mxu0
  %1581 = vmatprep.subr.mxu0 0.0
  %1582 = vmatpush1.msra.mxu0 %v1492
  %1583 = vmatprep.subr.mxu0 0.0
  %1584 = vmatpush1.msra.mxu0 %v1493
  %1585 = vmatprep.subr.mxu0 0.0
  %1586 = vmatpush1.msra.mxu0 0.0
  %1587 = vmatprep.subr.mxu0 0.0
  %1588 = vmatpush1.msra.mxu0 0.0
  %1589 = vmatprep.subr.mxu0 0.0
  %1590 = vmatpush1.msra.mxu0 0.0
  %1591 = vmatprep.subr.mxu0 0.0
  %1592 = vmatpush1.msra.mxu0 0.0
  %1593 = vmatprep.subr.mxu0 0.0
  %1594 = vmatpush1.msra.mxu0 0.0
  %1595 = vmatprep.subr.mxu0 0.0
  %1596 = vmatpush1.msra.mxu0 0.0
  %1597 = vmatprep.subr.mxu0 0.0
  %1598 = vmatpush1.msra.mxu0 0.0
  %1599 = vmatprep.subr.mxu0 0.0
  %1600 = vmatpush1.msra.mxu0 0.0
  %1601 = vmatprep.subr.mxu0 0.0
  %1602 = vmatpush1.msra.mxu0 0.0
  %1603 = vmatprep.subr.mxu0 0.0
  %1604 = vmatpush1.msra.mxu0 0.0
  %1605 = vmatprep.subr.mxu0 0.0
  %1606 = vmatpush1.msra.mxu0 0.0
  %1607 = vmatprep.subr.mxu0 0.0
  %1608 = vmatpush1.msra.mxu0 0.0
  %1609 = vmatprep.subr.mxu0 0.0
  %1610 = vmatpush1.msra.mxu0 0.0
  %1611 = vmatprep.subr.mxu0 0.0
  %1612 = vmatpush1.msra.mxu0 0.0
  %1613 = vmatprep.subr.mxu0 0.0
  %1614 = vmatpush1.msra.mxu0 0.0
  %1615 = vmatprep.subr.mxu0 0.0
  %1616 = vmatpush1.msra.mxu0 0.0
  %1617 = vmatprep.subr.mxu0 0.0
  %1618 = vmatpush1.msra.mxu0 0.0
  %1619 = vmatprep.subr.mxu0 0.0
  %1620 = vmatpush1.msra.mxu0 0.0
  %1621 = vmatprep.subr.mxu0 0.0
  %1622 = vmatpush1.msra.mxu0 0.0
  %1623 = vmatprep.subr.mxu0 0.0
  %1624 = vmatpush1.msra.mxu0 0.0
  %1625 = vmatprep.subr.mxu0 0.0
  %1626 = vmatpush1.msra.mxu0 0.0
  %1627 = vmatprep.subr.mxu0 0.0
  %1628 = vmatpush1.msra.mxu0 0.0
  %1629 = vmatprep.subr.mxu0 0.0
  %1630 = vmatpush1.msra.mxu0 0.0
  %1631 = vmatprep.subr.mxu0 0.0
  %1632 = vmatpush1.msra.mxu0 0.0
  %1633 = vmatprep.subr.mxu0 0.0
  %1634 = vmatpush1.msra.mxu0 0.0
  %1635 = vmatprep.subr.mxu0 0.0
  %1636 = vmatpush1.msra.mxu0 0.0
  %1637 = vmatprep.subr.mxu0 0.0
  %1638 = vmatpush1.msra.mxu0 0.0
  %1639 = vmatprep.subr.mxu0 0.0
  %1640 = vmatpush1.msra.mxu0 0.0
  %1641 = vmatprep.subr.mxu0 0.0
  %1642 = vmatpush1.msra.mxu0 0.0
  %1643 = vmatprep.subr.mxu0 0.0
  %1644 = vmatpush1.msra.mxu0 0.0
  %1645 = vmatprep.mubr.f32.mxu0 0.0
  %1646 = vmatmul.mubr.f32.gmra.mrb[0].mxu0 %v80
  %v1647 = vpop.f32.mrb[0].mxu0
  %v1648 = vadd.f32 %v1573, %v1647
  %v1649 = vpop.f32.mrb[0].mxu0
  %1650 = vmatprep.mubr.f32.mxu0 0.0
  %1651 = vmatmul.mubr.f32.gmra.mrb[0].mxu0 %v83
  %v1652 = vpop.f32.mrb[0].mxu0
  %v1653 = vadd.f32 %v1578, %v1652
  %v1654 = vpop.f32.mrb[0].mxu0
  %1655 = vdwg.mxu0
  %1656 = vmatprep.subr.mxu0 0.0
  %1657 = vmatpush1.msra.mxu0 %v1504
  %1658 = vmatprep.subr.mxu0 0.0
  %1659 = vmatpush1.msra.mxu0 %v1505
  %1660 = vmatprep.subr.mxu0 0.0
  %1661 = vmatpush1.msra.mxu0 0.0
  %1662 = vmatprep.subr.mxu0 0.0
  %1663 = vmatpush1.msra.mxu0 0.0
  %1664 = vmatprep.subr.mxu0 0.0
  %1665 = vmatpush1.msra.mxu0 0.0
  %1666 = vmatprep.subr.mxu0 0.0
  %1667 = vmatpush1.msra.mxu0 0.0
  %1668 = vmatprep.subr.mxu0 0.0
  %1669 = vmatpush1.msra.mxu0 0.0
  %1670 = vmatprep.subr.mxu0 0.0
  %1671 = vmatpush1.msra.mxu0 0.0
  %1672 = vmatprep.subr.mxu0 0.0
  %1673 = vmatpush1.msra.mxu0 0.0
  %1674 = vmatprep.subr.mxu0 0.0
  %1675 = vmatpush1.msra.mxu0 0.0
  %1676 = vmatprep.subr.mxu0 0.0
  %1677 = vmatpush1.msra.mxu0 0.0
  %1678 = vmatprep.subr.mxu0 0.0
  %1679 = vmatpush1.msra.mxu0 0.0
  %1680 = vmatprep.subr.mxu0 0.0
  %1681 = vmatpush1.msra.mxu0 0.0
  %1682 = vmatprep.subr.mxu0 0.0
  %1683 = vmatpush1.msra.mxu0 0.0
  %1684 = vmatprep.subr.mxu0 0.0
  %1685 = vmatpush1.msra.mxu0 0.0
  %1686 = vmatprep.subr.mxu0 0.0
  %1687 = vmatpush1.msra.mxu0 0.0
  %1688 = vmatprep.subr.mxu0 0.0
  %1689 = vmatpush1.msra.mxu0 0.0
  %1690 = vmatprep.subr.mxu0 0.0
  %1691 = vmatpush1.msra.mxu0 0.0
  %1692 = vmatprep.subr.mxu0 0.0
  %1693 = vmatpush1.msra.mxu0 0.0
  %1694 = vmatprep.subr.mxu0 0.0
  %1695 = vmatpush1.msra.mxu0 0.0
  %1696 = vmatprep.subr.mxu0 0.0
  %1697 = vmatpush1.msra.mxu0 0.0
  %1698 = vmatprep.subr.mxu0 0.0
  %1699 = vmatpush1.msra.mxu0 0.0
  %1700 = vmatprep.subr.mxu0 0.0
  %1701 = vmatpush1.msra.mxu0 0.0
  %1702 = vmatprep.subr.mxu0 0.0
  %1703 = vmatpush1.msra.mxu0 0.0
  %1704 = vmatprep.subr.mxu0 0.0
  %1705 = vmatpush1.msra.mxu0 0.0
  %1706 = vmatprep.subr.mxu0 0.0
  %1707 = vmatpush1.msra.mxu0 0.0
  %1708 = vmatprep.subr.mxu0 0.0
  %1709 = vmatpush1.msra.mxu0 0.0
  %1710 = vmatprep.subr.mxu0 0.0
  %1711 = vmatpush1.msra.mxu0 0.0
  %1712 = vmatprep.subr.mxu0 0.0
  %1713 = vmatpush1.msra.mxu0 0.0
  %1714 = vmatprep.subr.mxu0 0.0
  %1715 = vmatpush1.msra.mxu0 0.0
  %1716 = vmatprep.subr.mxu0 0.0
  %1717 = vmatpush1.msra.mxu0 0.0
  %1718 = vmatprep.subr.mxu0 0.0
  %1719 = vmatpush1.msra.mxu0 0.0
  %1720 = vmatprep.mubr.f32.mxu0 0.0
  %1721 = vmatmul.mubr.f32.gmra.mrb[0].mxu0 %v80
  %v1722 = vpop.f32.mrb[0].mxu0
  %v1723 = vadd.f32 0.0, %v1722
  %v1724 = vpop.f32.mrb[0].mxu0
  %1725 = vmatprep.mubr.f32.mxu0 0.0
  %1726 = vmatmul.mubr.f32.gmra.mrb[0].mxu0 %v83
  %v1727 = vpop.f32.mrb[0].mxu0
  %v1728 = vadd.f32 0.0, %v1727
  %v1729 = vpop.f32.mrb[0].mxu0
  %1730 = vdwg.mxu0
  %1731 = vmatprep.subr.mxu0 0.0
  %1732 = vmatpush1.msra.mxu0 %v1492
  %1733 = vmatprep.subr.mxu0 0.0
  %1734 = vmatpush1.msra.mxu0 %v1493
  %1735 = vmatprep.subr.mxu0 0.0
  %1736 = vmatpush1.msra.mxu0 0.0
  %1737 = vmatprep.subr.mxu0 0.0
  %1738 = vmatpush1.msra.mxu0 0.0
  %1739 = vmatprep.subr.mxu0 0.0
  %1740 = vmatpush1.msra.mxu0 0.0
  %1741 = vmatprep.subr.mxu0 0.0
  %1742 = vmatpush1.msra.mxu0 0.0
  %1743 = vmatprep.subr.mxu0 0.0
  %1744 = vmatpush1.msra.mxu0 0.0
  %1745 = vmatprep.subr.mxu0 0.0
  %1746 = vmatpush1.msra.mxu0 0.0
  %1747 = vmatprep.subr.mxu0 0.0
  %1748 = vmatpush1.msra.mxu0 0.0
  %1749 = vmatprep.subr.mxu0 0.0
  %1750 = vmatpush1.msra.mxu0 0.0
  %1751 = vmatprep.subr.mxu0 0.0
  %1752 = vmatpush1.msra.mxu0 0.0
  %1753 = vmatprep.subr.mxu0 0.0
  %1754 = vmatpush1.msra.mxu0 0.0
  %1755 = vmatprep.subr.mxu0 0.0
  %1756 = vmatpush1.msra.mxu0 0.0
  %1757 = vmatprep.subr.mxu0 0.0
  %1758 = vmatpush1.msra.mxu0 0.0
  %1759 = vmatprep.subr.mxu0 0.0
  %1760 = vmatpush1.msra.mxu0 0.0
  %1761 = vmatprep.subr.mxu0 0.0
  %1762 = vmatpush1.msra.mxu0 0.0
  %1763 = vmatprep.subr.mxu0 0.0
  %1764 = vmatpush1.msra.mxu0 0.0
  %1765 = vmatprep.subr.mxu0 0.0
  %1766 = vmatpush1.msra.mxu0 0.0
  %1767 = vmatprep.subr.mxu0 0.0
  %1768 = vmatpush1.msra.mxu0 0.0
  %1769 = vmatprep.subr.mxu0 0.0
  %1770 = vmatpush1.msra.mxu0 0.0
  %1771 = vmatprep.subr.mxu0 0.0
  %1772 = vmatpush1.msra.mxu0 0.0
  %1773 = vmatprep.subr.mxu0 0.0
  %1774 = vmatpush1.msra.mxu0 0.0
  %1775 = vmatprep.subr.mxu0 0.0
  %1776 = vmatpush1.msra.mxu0 0.0
  %1777 = vmatprep.subr.mxu0 0.0
  %1778 = vmatpush1.msra.mxu0 0.0
  %1779 = vmatprep.subr.mxu0 0.0
  %1780 = vmatpush1.msra.mxu0 0.0
  %1781 = vmatprep.subr.mxu0 0.0
  %1782 = vmatpush1.msra.mxu0 0.0
  %1783 = vmatprep.subr.mxu0 0.0
  %1784 = vmatpush1.msra.mxu0 0.0
  %1785 = vmatprep.subr.mxu0 0.0
  %1786 = vmatpush1.msra.mxu0 0.0
  %1787 = vmatprep.subr.mxu0 0.0
  %1788 = vmatpush1.msra.mxu0 0.0
  %1789 = vmatprep.subr.mxu0 0.0
  %1790 = vmatpush1.msra.mxu0 0.0
  %1791 = vmatprep.subr.mxu0 0.0
  %1792 = vmatpush1.msra.mxu0 0.0
  %1793 = vmatprep.subr.mxu0 0.0
  %1794 = vmatpush1.msra.mxu0 0.0
  %1795 = vmatprep.mubr.f32.mxu0 0.0
  %1796 = vmatmul.mubr.f32.gmra.mrb[0].mxu0 %v161
  %v1797 = vpop.f32.mrb[0].mxu0
  %v1798 = vadd.f32 0.0, %v1797
  %v1799 = vpop.f32.mrb[0].mxu0
  %1800 = vmatprep.mubr.f32.mxu0 0.0
  %1801 = vmatmul.mubr.f32.gmra.mrb[0].mxu0 %v164
  %v1802 = vpop.f32.mrb[0].mxu0
  %v1803 = vadd.f32 0.0, %v1802
  %v1804 = vpop.f32.mrb[0].mxu0
  %1805 = vdwg.mxu0
  %v1806 = vsub.f32 %v1723, %v1798
  %v1807 = vsub.f32 %v1728, %v1803
  %1808 = vmatprep.subr.mxu0 0.0
  %1809 = vmatpush1.msra.mxu0 %v52
  %1810 = vmatprep.subr.mxu0 0.0
  %1811 = vmatpush1.msra.mxu0 %v53
  %1812 = vmatprep.subr.mxu0 0.0
  %1813 = vmatpush1.msra.mxu0 %v54
  %1814 = vmatprep.subr.mxu0 0.0
  %1815 = vmatpush1.msra.mxu0 %v55
  %1816 = vmatprep.subr.mxu0 0.0
  %1817 = vmatpush1.msra.mxu0 %v56
  %1818 = vmatprep.subr.mxu0 0.0
  %1819 = vmatpush1.msra.mxu0 %v57
  %1820 = vmatprep.subr.mxu0 0.0
  %1821 = vmatpush1.msra.mxu0 %v58
  %1822 = vmatprep.subr.mxu0 0.0
  %1823 = vmatpush1.msra.mxu0 %v59
  %1824 = vmatprep.subr.mxu0 0.0
  %1825 = vmatpush1.msra.mxu0 %v60
  %1826 = vmatprep.subr.mxu0 0.0
  %1827 = vmatpush1.msra.mxu0 %v61
  %1828 = vmatprep.subr.mxu0 0.0
  %1829 = vmatpush1.msra.mxu0 %v62
  %1830 = vmatprep.subr.mxu0 0.0
  %1831 = vmatpush1.msra.mxu0 %v63
  %1832 = vmatprep.subr.mxu0 0.0
  %1833 = vmatpush1.msra.mxu0 %v64
  %1834 = vmatprep.subr.mxu0 0.0
  %1835 = vmatpush1.msra.mxu0 %v65
  %1836 = vmatprep.subr.mxu0 0.0
  %1837 = vmatpush1.msra.mxu0 %v66
  %1838 = vmatprep.subr.mxu0 0.0
  %1839 = vmatpush1.msra.mxu0 %v67
  %1840 = vmatprep.subr.mxu0 0.0
  %1841 = vmatpush1.msra.mxu0 0.0
  %1842 = vmatprep.subr.mxu0 0.0
  %1843 = vmatpush1.msra.mxu0 0.0
  %1844 = vmatprep.subr.mxu0 0.0
  %1845 = vmatpush1.msra.mxu0 0.0
  %1846 = vmatprep.subr.mxu0 0.0
  %1847 = vmatpush1.msra.mxu0 0.0
  %1848 = vmatprep.subr.mxu0 0.0
  %1849 = vmatpush1.msra.mxu0 0.0
  %1850 = vmatprep.subr.mxu0 0.0
  %1851 = vmatpush1.msra.mxu0 0.0
  %1852 = vmatprep.subr.mxu0 0.0
  %1853 = vmatpush1.msra.mxu0 0.0
  %1854 = vmatprep.subr.mxu0 0.0
  %1855 = vmatpush1.msra.mxu0 0.0
  %1856 = vmatprep.subr.mxu0 0.0
  %1857 = vmatpush1.msra.mxu0 0.0
  %1858 = vmatprep.subr.mxu0 0.0
  %1859 = vmatpush1.msra.mxu0 0.0
  %1860 = vmatprep.subr.mxu0 0.0
  %1861 = vmatpush1.msra.mxu0 0.0
  %1862 = vmatprep.subr.mxu0 0.0
  %1863 = vmatpush1.msra.mxu0 0.0
  %1864 = vmatprep.subr.mxu0 0.0
  %1865 = vmatpush1.msra.mxu0 0.0
  %1866 = vmatprep.subr.mxu0 0.0
  %1867 = vmatpush1.msra.mxu0 0.0
  %1868 = vmatprep.subr.mxu0 0.0
  %1869 = vmatpush1.msra.mxu0 0.0
  %1870 = vmatprep.subr.mxu0 0.0
  %1871 = vmatpush1.msra.mxu0 0.0
  %1872 = vmatprep.mubr.f32.mxu0 0.0
  %1873 = vmatmul.mubr.f32.gmra.mrb[0].mxu0 %v1806
  %v1874 = vpop.f32.mrb[0].mxu0
  %v1875 = vadd.f32 0.0, %v1874
  %v1876 = vpop.f32.mrb[0].mxu0
  %1877 = vmatprep.mubr.f32.mxu0 0.0
  %1878 = vmatmul.mubr.f32.gmra.mrb[0].mxu0 %v1807
  %v1879 = vpop.f32.mrb[0].mxu0
  %v1880 = vadd.f32 0.0, %v1879
  %v1881 = vpop.f32.mrb[0].mxu0
  %1882 = vdwg.mxu0
  %1883 = vmatprep.subr.mxu0 0.0
  %1884 = vmatpush1.msra.mxu0 %v36
  %1885 = vmatprep.subr.mxu0 0.0
  %1886 = vmatpush1.msra.mxu0 %v37
  %1887 = vmatprep.subr.mxu0 0.0
  %1888 = vmatpush1.msra.mxu0 %v38
  %1889 = vmatprep.subr.mxu0 0.0
  %1890 = vmatpush1.msra.mxu0 %v39
  %1891 = vmatprep.subr.mxu0 0.0
  %1892 = vmatpush1.msra.mxu0 %v40
  %1893 = vmatprep.subr.mxu0 0.0
  %1894 = vmatpush1.msra.mxu0 %v41
  %1895 = vmatprep.subr.mxu0 0.0
  %1896 = vmatpush1.msra.mxu0 %v42
  %1897 = vmatprep.subr.mxu0 0.0
  %1898 = vmatpush1.msra.mxu0 %v43
  %1899 = vmatprep.subr.mxu0 0.0
  %1900 = vmatpush1.msra.mxu0 %v44
  %1901 = vmatprep.subr.mxu0 0.0
  %1902 = vmatpush1.msra.mxu0 %v45
  %1903 = vmatprep.subr.mxu0 0.0
  %1904 = vmatpush1.msra.mxu0 %v46
  %1905 = vmatprep.subr.mxu0 0.0
  %1906 = vmatpush1.msra.mxu0 %v47
  %1907 = vmatprep.subr.mxu0 0.0
  %1908 = vmatpush1.msra.mxu0 %v48
  %1909 = vmatprep.subr.mxu0 0.0
  %1910 = vmatpush1.msra.mxu0 %v49
  %1911 = vmatprep.subr.mxu0 0.0
  %1912 = vmatpush1.msra.mxu0 %v50
  %1913 = vmatprep.subr.mxu0 0.0
  %1914 = vmatpush1.msra.mxu0 %v51
  %1915 = vmatprep.subr.mxu0 0.0
  %1916 = vmatpush1.msra.mxu0 0.0
  %1917 = vmatprep.subr.mxu0 0.0
  %1918 = vmatpush1.msra.mxu0 0.0
  %1919 = vmatprep.subr.mxu0 0.0
  %1920 = vmatpush1.msra.mxu0 0.0
  %1921 = vmatprep.subr.mxu0 0.0
  %1922 = vmatpush1.msra.mxu0 0.0
  %1923 = vmatprep.subr.mxu0 0.0
  %1924 = vmatpush1.msra.mxu0 0.0
  %1925 = vmatprep.subr.mxu0 0.0
  %1926 = vmatpush1.msra.mxu0 0.0
  %1927 = vmatprep.subr.mxu0 0.0
  %1928 = vmatpush1.msra.mxu0 0.0
  %1929 = vmatprep.subr.mxu0 0.0
  %1930 = vmatpush1.msra.mxu0 0.0
  %1931 = vmatprep.subr.mxu0 0.0
  %1932 = vmatpush1.msra.mxu0 0.0
  %1933 = vmatprep.subr.mxu0 0.0
  %1934 = vmatpush1.msra.mxu0 0.0
  %1935 = vmatprep.subr.mxu0 0.0
  %1936 = vmatpush1.msra.mxu0 0.0
  %1937 = vmatprep.subr.mxu0 0.0
  %1938 = vmatpush1.msra.mxu0 0.0
  %1939 = vmatprep.subr.mxu0 0.0
  %1940 = vmatpush1.msra.mxu0 0.0
  %1941 = vmatprep.subr.mxu0 0.0
  %1942 = vmatpush1.msra.mxu0 0.0
  %1943 = vmatprep.subr.mxu0 0.0
  %1944 = vmatpush1.msra.mxu0 0.0
  %1945 = vmatprep.subr.mxu0 0.0
  %1946 = vmatpush1.msra.mxu0 0.0
  %1947 = vmatprep.mubr.f32.mxu0 0.0
  %1948 = vmatmul.mubr.f32.gmra.mrb[0].mxu0 %v1648
  %v1949 = vpop.f32.mrb[0].mxu0
  %v1950 = vadd.f32 %v1875, %v1949
  %v1951 = vpop.f32.mrb[0].mxu0
  %1952 = vmatprep.mubr.f32.mxu0 0.0
  %1953 = vmatmul.mubr.f32.gmra.mrb[0].mxu0 %v1653
  %v1954 = vpop.f32.mrb[0].mxu0
  %v1955 = vadd.f32 %v1880, %v1954
  %v1956 = vpop.f32.mrb[0].mxu0
  %1957 = vdwg.mxu0
  %1958 = vst [vmem:[%s9] sm:$0xff] %v1950
  %1959 = vst [vmem:[%s9 + $0x8] sm:$0xff] %v1955
  // Predicated region
  $region38: #{_isub_impl.1} parent=0 // pred_check
    _
  $region39: #{_isub_impl.1} parent=0 // pred_check_branch
    %1961 = sbr.rel (0) target = $region41
  $region40: #{_isub_impl.1} parent=0 // pred_region
    _
  $region41: #{_isub_impl.1} parent=0 // pred_fallthru
    _
  // Predicated region
  $region42: #{_isub_impl.1} parent=0 // pred_check
    _
  $region43: #{_isub_impl.1} parent=0 // pred_check_branch
    %1963 = sbr.rel (0) target = $region45
  $region44: #{_isub_impl.1} parent=0 // pred_region
    _
  $region45: #{_isub_impl.1} parent=0 // pred_fallthru
    _

</llo_original>
